<compile_context>
chip_gen: v7x
topology: tpu7x:2x2x1
jax: 0.10.0
libtpu: 0.0.40
codegen_flags: <defaults>
</compile_context>

<pallas_src>
import jax
import jax.numpy as jnp
from jax import lax
from jax.experimental import pallas as pl
from jax.experimental.pallas import tpu as pltpu

F32 = jnp.float32


def model_forward(params, bert_sentences, bert_sentence_types, bert_att_mask, a, v,
                  time_len):
    """Whole forward pass in a single fused Pallas kernel."""
    del bert_sentence_types  # only feeds the BERT stand-in (unused here)

    B, L = bert_sentences.shape
    l_av, d_a = a.shape[1], a.shape[2]
    d_v = v.shape[2]
    d_t, d_common = params["W_t"].shape
    d_out = params["mlp_Wd"].shape[1]
    k_out = params["mlp_Wk"].shape[1]
    t_out = params["mlp_Wt"].shape[1]
    num_class = params["cls_w"].shape[1]
    pad_before = (L - l_av) // 2
    BL = B * L
    assert time_len >= L  # zero-padded time rows t >= L contribute nothing below

    # TODO(synk): pretrained 'bert-base-uncased' has no in-script Pallas equivalent;
    # a deterministic embedding-table lookup stands in for the BERT hidden states.
    t_emb = params["bert_emb"][bert_sentences].astype(F32).reshape(BL, d_t)

    # Free (bitcast-level) reshapes so every in-kernel tensor is 2-D with D on lanes.
    a2d = a.astype(F32).reshape(B * l_av, d_a)
    v2d = v.astype(F32).reshape(B * l_av, d_v)
    mask2d = bert_att_mask.astype(F32).reshape(BL, 1)

    # Parameter-only prep (no activation round trips):
    #  * block-diagonal transposed MLP time-weights: per-batch time contraction
    #    becomes one lane-dense (B*t_out, B*L) @ (B*L, d_out) matmul in-kernel.
    #  * pooling matrix folding mean-over-t and mean-over-k into one tiny matmul.
    wtT_blk = jnp.kron(jnp.eye(B, dtype=F32), params["mlp_Wt"][:L, :].T)
    pool = jnp.kron(jnp.eye(B, dtype=F32),
                    jnp.full((1, t_out), 1.0 / (t_out * k_out), F32))
    wk_flat = params["mlp_Wk"].astype(F32).reshape(-1)      # (3*k_out,) -> SMEM

    def kernel(t_ref, a_ref, v_ref, m_ref, wt_ref,
               caw_ref, cab_ref, cvw_ref, cvb_ref,
               lag_ref, lab_ref, lvg_ref, lvb_ref,
               wd_ref, wk_ref, wtT_ref, pool_ref, cw_ref, cb_ref,
               o_ref, apad_ref, vpad_ref, hdin_ref):
        mask_valid = m_ref[...] > 0.5                         # (B*L, 1) bool

        def conv_ln_relu_store(x_ref, pad_ref, w_ref, b_ref, g_ref, beta_ref, row0):
            # pad_ref: (B*(L+2), cin) zero-initialised scratch (time pad + conv halo)
            pad_ref[...] = jnp.zeros_like(pad_ref)
            for b in range(B):
                base = b * (L + 2)
                # time-pad l_av -> L inside the conv halo
                pad_ref[base + 1 + pad_before:base + 1 + pad_before + l_av, :] = (
                    x_ref[b * l_av:(b + 1) * l_av, :])
                # masked_fill: all-zero rows that the text mask marks valid -> 1e-6
                xt = pad_ref[base + 1:base + 1 + L, :]        # (L, cin)
                row_zero = jnp.sum(jnp.abs(xt), axis=-1, keepdims=True) == 0.0
                fill = jnp.logical_and(row_zero, mask_valid[b * L:(b + 1) * L, :])
                pad_ref[base + 1:base + 1 + L, :] = jnp.where(fill, 1e-6, xt)
                # Conv1d(k=3, s=1, p=1) as three shifted matmuls on the halo'd input
                y = jnp.dot(pad_ref[base:base + L, :], w_ref[0],
                            preferred_element_type=F32)
                y = y + jnp.dot(pad_ref[base + 1:base + 1 + L, :], w_ref[1],
                                preferred_element_type=F32)
                y = y + jnp.dot(pad_ref[base + 2:base + 2 + L, :], w_ref[2],
                                preferred_element_type=F32)
                y = y + b_ref[...]
                # fused LayerNorm(eps=1e-6) + ReLU on the VMEM-resident conv output
                mu = jnp.mean(y, axis=-1, keepdims=True)
                yc = y - mu
                var = jnp.mean(yc * yc, axis=-1, keepdims=True)
                y = yc * lax.rsqrt(var + 1e-6) * g_ref[...] + beta_ref[...]
                hdin_ref[row0 + b * L:row0 + (b + 1) * L, :] = jnp.maximum(y, 0.0)

        # text path: W_t projection (Linear, no bias); dropout = identity (eval)
        hdin_ref[0:BL, :] = jnp.dot(t_ref[...], wt_ref[...],
                                    preferred_element_type=F32)
        # audio / video paths: pad + masked_fill + conv + LN + ReLU, all fused
        conv_ln_relu_store(a_ref, apad_ref, caw_ref, cab_ref, lag_ref, lab_ref, BL)
        conv_ln_relu_store(v_ref, vpad_ref, cvw_ref, cvb_ref, lvg_ref, lvb_ref, 2 * BL)

        # ---- MLP-encoder stand-in: feature -> k -> time projections (ReLU each) ----
        # TODO(synk): MLPEncoder's definition is not provided with the module; kept as
        # the same per-axis Linear+ReLU stand-in as the reference implementation.
        hd = jnp.maximum(jnp.dot(hdin_ref[...], wd_ref[...],
                                 preferred_element_type=F32), 0.0)    # (3*B*L, d_out)
        hd_t, hd_a, hd_v = hd[0:BL], hd[BL:2 * BL], hd[2 * BL:3 * BL]

        wtT = wtT_ref[...]                                    # (B*t_out, B*L) blockdiag
        S = jnp.zeros((B * t_out, d_out), F32)
        for p in range(k_out):
            # k-axis (3-way) contraction as a VPU weighted sum; D stays on lanes
            hk = jnp.maximum(wk_ref[0 * k_out + p] * hd_t
                             + wk_ref[1 * k_out + p] * hd_a
                             + wk_ref[2 * k_out + p] * hd_v, 0.0)     # (B*L, d_out)
            # time contraction for every batch at once (block-diagonal weights)
            S = S + jnp.maximum(jnp.dot(wtT, hk, preferred_element_type=F32), 0.0)

        # mean over (t_out, k_out) folded into `pool`, then the classifier head
        pooled = jnp.dot(pool_ref[...], S, preferred_element_type=F32)  # (B, d_out)
        o_ref[...] = jnp.dot(pooled, cw_ref[...],
                             preferred_element_type=F32) + cb_ref[...]

    vspec = pl.BlockSpec(memory_space=pltpu.MemorySpace.VMEM)
    sspec = pl.BlockSpec(memory_space=pltpu.MemorySpace.SMEM)

    return pl.pallas_call(
        kernel,
        out_shape=jax.ShapeDtypeStruct((B, num_class), F32),
        in_specs=[vspec] * 14 + [sspec] + [vspec] * 4,
        out_specs=vspec,
        scratch_shapes=[pltpu.VMEM((B * (L + 2), d_a), F32),      # padded audio
                        pltpu.VMEM((B * (L + 2), d_v), F32),      # padded video
                        pltpu.VMEM((3 * BL, d_common), F32)],     # stacked modalities
    )(t_emb, a2d, v2d, mask2d, params["W_t"],
      params["conv_a_w"], params["conv_a_b"].reshape(1, d_common),
      params["conv_v_w"], params["conv_v_b"].reshape(1, d_common),
      params["ln_a_g"].reshape(1, d_common), params["ln_a_b"].reshape(1, d_common),
      params["ln_v_g"].reshape(1, d_common), params["ln_v_b"].reshape(1, d_common),
      params["mlp_Wd"], wk_flat, wtT_blk, pool,
      params["cls_w"], params["cls_b"].reshape(1, num_class))


def init_params(key, vocab, d_t, d_a, d_v, d_common, time_len, t_out, k_out, d_out,
                num_class):
    ks = jax.random.split(key, 12)
    s = 0.05
    return {
        "bert_emb": s * jax.random.normal(ks[0], (vocab, d_t), F32),
        "W_t":      s * jax.random.normal(ks[1], (d_t, d_common), F32),
        "conv_a_w": s * jax.random.normal(ks[2], (3, d_a, d_common), F32),
        "conv_a_b": s * jax.random.normal(ks[3], (d_common,), F32),
        "conv_v_w": s * jax.random.normal(ks[4], (3, d_v, d_common), F32),
        "conv_v_b": s * jax.random.normal(ks[5], (d_common,), F32),
        "ln_a_g": jnp.ones((d_common,), F32), "ln_a_b": jnp.zeros((d_common,), F32),
        "ln_v_g": jnp.ones((d_common,), F32), "ln_v_b": jnp.zeros((d_common,), F32),
        "mlp_Wd": s * jax.random.normal(ks[6], (d_common, d_out), F32),
        "mlp_Wk": s * jax.random.normal(ks[7], (3, k_out), F32),
        "mlp_Wt": s * jax.random.normal(ks[8], (time_len, t_out), F32),
        "cls_w":  s * jax.random.normal(ks[9], (d_out, num_class), F32),
        "cls_b":  s * jax.random.normal(ks[10], (num_class,), F32),
    }


if __name__ == "__main__":
    B, L, l_av = 2, 16, 12
    d_t, d_a, d_v, d_common = 32, 16, 16, 32
    time_len, num_class, vocab = 24, 3, 100
    t_out, k_out, d_out = 4, 3, 32          # d_outs[-1]

    key = jax.random.PRNGKey(0)
    kp, k1, k2, k3 = jax.random.split(key, 4)
    params = init_params(kp, vocab, d_t, d_a, d_v, d_common, time_len,
                         t_out, k_out, d_out, num_class)

    bert_sentences = jax.random.randint(k1, (B, L), 0, vocab, dtype=jnp.int32)
    bert_sentence_types = jnp.zeros((B, L), jnp.int32)
    lengths = jnp.array([16, 12], jnp.int32)
    bert_sentence_att_mask = (jnp.arange(L)[None, :] < lengths[:, None]).astype(jnp.int32)
    a = jax.random.normal(k2, (B, l_av, d_a), F32)
    v = jax.random.normal(k3, (B, l_av, d_v), F32)

    fwd = jax.jit(model_forward, static_argnums=(6,))
    out = fwd(params, bert_sentences, bert_sentence_types,
              bert_sentence_att_mask, a, v, time_len)
    jax.block_until_ready(out)
    assert out.shape == (B, num_class)
    print("KERNEL_OK")
</pallas_src>

<mosaic_0001>
module attributes {stable_mosaic.version = 11 : i64} {
  func.func @kernel(%arg0: memref<32x32xf32, #tpu.memory_space<vmem>>, %arg1: memref<24x16xf32, #tpu.memory_space<vmem>>, %arg2: memref<24x16xf32, #tpu.memory_space<vmem>>, %arg3: memref<32x1xf32, #tpu.memory_space<vmem>>, %arg4: memref<32x32xf32, #tpu.memory_space<vmem>>, %arg5: memref<3x16x32xf32, #tpu.memory_space<vmem>>, %arg6: memref<1x32xf32, #tpu.memory_space<vmem>>, %arg7: memref<3x16x32xf32, #tpu.memory_space<vmem>>, %arg8: memref<1x32xf32, #tpu.memory_space<vmem>>, %arg9: memref<1x32xf32, #tpu.memory_space<vmem>>, %arg10: memref<1x32xf32, #tpu.memory_space<vmem>>, %arg11: memref<1x32xf32, #tpu.memory_space<vmem>>, %arg12: memref<1x32xf32, #tpu.memory_space<vmem>>, %arg13: memref<32x32xf32, #tpu.memory_space<vmem>>, %arg14: memref<9xf32, #tpu.memory_space<smem>>, %arg15: memref<8x32xf32, #tpu.memory_space<vmem>>, %arg16: memref<2x8xf32, #tpu.memory_space<vmem>>, %arg17: memref<32x3xf32, #tpu.memory_space<vmem>>, %arg18: memref<1x3xf32, #tpu.memory_space<vmem>>, %arg19: memref<2x3xf32, #tpu.memory_space<vmem>>, %arg20: memref<36x16xf32, #tpu.memory_space<vmem>>, %arg21: memref<36x16xf32, #tpu.memory_space<vmem>>, %arg22: memref<96x32xf32, #tpu.memory_space<vmem>>) attributes {dimension_semantics = [], scalar_prefetch = 0 : i64, scratch_operands = 3 : i64, tpu.core_type = #tpu.core_type<tc>} {
    %c0 = arith.constant 0 : index
    %c0_0 = arith.constant 0 : index
    %0 = vector.load %arg3[%c0, %c0_0] : memref<32x1xf32, #tpu.memory_space<vmem>>, vector<32x1xf32>
    %cst = arith.constant 5.000000e-01 : f32
    %1 = vector.broadcast %cst : f32 to vector<32x1xf32>
    %2 = arith.cmpf ogt, %0, %1 : vector<32x1xf32>
    %c0_1 = arith.constant 0 : index
    %c0_2 = arith.constant 0 : index
    %3 = vector.load %arg0[%c0_1, %c0_2] : memref<32x32xf32, #tpu.memory_space<vmem>>, vector<32x32xf32>
    %c0_3 = arith.constant 0 : index
    %c0_4 = arith.constant 0 : index
    %4 = vector.load %arg4[%c0_3, %c0_4] : memref<32x32xf32, #tpu.memory_space<vmem>>, vector<32x32xf32>
    %cst_5 = arith.constant dense<0.000000e+00> : vector<32x32xf32>
    %5 = tpu.matmul %3, %4, %cst_5 {dimension_numbers = #tpu.dot_dimension_numbers<[1], [0], [0], [1], [0, 0, 1, 1], [], []>} : vector<32x32xf32>, vector<32x32xf32>, vector<32x32xf32> -> vector<32x32xf32>
    %c0_6 = arith.constant 0 : index
    %c0_7 = arith.constant 0 : index
    %6 = vector.load %arg22[%c0_6, %c0_7] : memref<96x32xf32, #tpu.memory_space<vmem>>, vector<32x32xf32>
    tpu.vector_store %arg22[%c0_6, %c0_7], %5 {strides = array<i32>} : memref<96x32xf32, #tpu.memory_space<vmem>>, vector<32x32xf32>,
    %cst_8 = arith.constant 0.000000e+00 : f32
    %7 = vector.broadcast %cst_8 : f32 to vector<36x16xf32>
    %c0_9 = arith.constant 0 : index
    %c0_10 = arith.constant 0 : index
    %8 = vector.load %arg20[%c0_9, %c0_10] : memref<36x16xf32, #tpu.memory_space<vmem>>, vector<36x16xf32>
    tpu.vector_store %arg20[%c0_9, %c0_10], %7 {strides = array<i32>} : memref<36x16xf32, #tpu.memory_space<vmem>>, vector<36x16xf32>,
    %c0_11 = arith.constant 0 : index
    %c0_12 = arith.constant 0 : index
    %9 = vector.load %arg1[%c0_11, %c0_12] : memref<24x16xf32, #tpu.memory_space<vmem>>, vector<12x16xf32>
    %c3 = arith.constant 3 : index
    %c0_13 = arith.constant 0 : index
    %10 = vector.load %arg20[%c3, %c0_13] : memref<36x16xf32, #tpu.memory_space<vmem>>, vector<12x16xf32>
    tpu.vector_store %arg20[%c3, %c0_13], %9 {strides = array<i32>} : memref<36x16xf32, #tpu.memory_space<vmem>>, vector<12x16xf32>,
    %c1 = arith.constant 1 : index
    %c0_14 = arith.constant 0 : index
    %11 = vector.load %arg20[%c1, %c0_14] : memref<36x16xf32, #tpu.memory_space<vmem>>, vector<16x16xf32>
    %12 = math.absf %11 : vector<16x16xf32>
    %cst_15 = arith.constant dense<0.000000e+00> : vector<16xf32>
    %13 = vector.multi_reduction <add>, %12, %cst_15 [1] : vector<16x16xf32> to vector<16xf32>
    %14 = vector.shape_cast %13 : vector<16xf32> to vector<16x1xf32>
    %cst_16 = arith.constant 0.000000e+00 : f32
    %15 = vector.broadcast %cst_16 : f32 to vector<16x1xf32>
    %16 = arith.cmpf oeq, %14, %15 : vector<16x1xf32>
    %17 = vector.extract_strided_slice %2 {offsets = [0, 0], sizes = [16, 1], strides = [1, 1]} : vector<32x1xi1> to vector<16x1xi1>
    %18 = arith.andi %16, %17 : vector<16x1xi1>
    %cst_17 = arith.constant 9.99999997E-7 : f32
    %19 = vector.shape_cast %18 : vector<16x1xi1> to vector<16x1xi1>
    %20 = vector.broadcast %19 : vector<16x1xi1> to vector<16x16xi1>
    %21 = vector.broadcast %cst_17 : f32 to vector<16x16xf32>
    %22 = arith.select %20, %21, %11 : vector<16x16xi1>, vector<16x16xf32>
    %c1_18 = arith.constant 1 : index
    %c0_19 = arith.constant 0 : index
    %23 = vector.load %arg20[%c1_18, %c0_19] : memref<36x16xf32, #tpu.memory_space<vmem>>, vector<16x16xf32>
    tpu.vector_store %arg20[%c1_18, %c0_19], %22 {strides = array<i32>} : memref<36x16xf32, #tpu.memory_space<vmem>>, vector<16x16xf32>,
    %c0_20 = arith.constant 0 : index
    %c0_21 = arith.constant 0 : index
    %24 = vector.load %arg20[%c0_20, %c0_21] : memref<36x16xf32, #tpu.memory_space<vmem>>, vector<16x16xf32>
    %c0_22 = arith.constant 0 : index
    %c0_23 = arith.constant 0 : index
    %c0_24 = arith.constant 0 : index
    %25 = vector.load %arg5[%c0_22, %c0_23, %c0_24] : memref<3x16x32xf32, #tpu.memory_space<vmem>>, vector<1x16x32xf32>
    %26 = vector.shape_cast %25 : vector<1x16x32xf32> to vector<16x32xf32>
    %cst_25 = arith.constant dense<0.000000e+00> : vector<16x32xf32>
    %27 = tpu.matmul %24, %26, %cst_25 {dimension_numbers = #tpu.dot_dimension_numbers<[1], [0], [0], [1], [0, 0, 1, 1], [], []>} : vector<16x16xf32>, vector<16x32xf32>, vector<16x32xf32> -> vector<16x32xf32>
    %c1_26 = arith.constant 1 : index
    %c0_27 = arith.constant 0 : index
    %28 = vector.load %arg20[%c1_26, %c0_27] : memref<36x16xf32, #tpu.memory_space<vmem>>, vector<16x16xf32>
    %c1_28 = arith.constant 1 : index
    %c0_29 = arith.constant 0 : index
    %c0_30 = arith.constant 0 : index
    %29 = vector.load %arg5[%c1_28, %c0_29, %c0_30] : memref<3x16x32xf32, #tpu.memory_space<vmem>>, vector<1x16x32xf32>
    %30 = vector.shape_cast %29 : vector<1x16x32xf32> to vector<16x32xf32>
    %cst_31 = arith.constant dense<0.000000e+00> : vector<16x32xf32>
    %31 = tpu.matmul %28, %30, %cst_31 {dimension_numbers = #tpu.dot_dimension_numbers<[1], [0], [0], [1], [0, 0, 1, 1], [], []>} : vector<16x16xf32>, vector<16x32xf32>, vector<16x32xf32> -> vector<16x32xf32>
    %32 = arith.addf %27, %31 : vector<16x32xf32>
    %c2 = arith.constant 2 : index
    %c0_32 = arith.constant 0 : index
    %33 = vector.load %arg20[%c2, %c0_32] : memref<36x16xf32, #tpu.memory_space<vmem>>, vector<16x16xf32>
    %c2_33 = arith.constant 2 : index
    %c0_34 = arith.constant 0 : index
    %c0_35 = arith.constant 0 : index
    %34 = vector.load %arg5[%c2_33, %c0_34, %c0_35] : memref<3x16x32xf32, #tpu.memory_space<vmem>>, vector<1x16x32xf32>
    %35 = vector.shape_cast %34 : vector<1x16x32xf32> to vector<16x32xf32>
    %cst_36 = arith.constant dense<0.000000e+00> : vector<16x32xf32>
    %36 = tpu.matmul %33, %35, %cst_36 {dimension_numbers = #tpu.dot_dimension_numbers<[1], [0], [0], [1], [0, 0, 1, 1], [], []>} : vector<16x16xf32>, vector<16x32xf32>, vector<16x32xf32> -> vector<16x32xf32>
    %37 = arith.addf %32, %36 : vector<16x32xf32>
    %c0_37 = arith.constant 0 : index
    %c0_38 = arith.constant 0 : index
    %38 = vector.load %arg6[%c0_37, %c0_38] : memref<1x32xf32, #tpu.memory_space<vmem>>, vector<1x32xf32>
    %39 = vector.broadcast %38 : vector<1x32xf32> to vector<16x32xf32>
    %40 = arith.addf %37, %39 : vector<16x32xf32>
    %cst_39 = arith.constant dense<0.000000e+00> : vector<16xf32>
    %41 = vector.multi_reduction <add>, %40, %cst_39 [1] : vector<16x32xf32> to vector<16xf32>
    %42 = vector.shape_cast %41 : vector<16xf32> to vector<16x1xf32>
    %cst_40 = arith.constant 3.200000e+01 : f32
    %43 = vector.broadcast %cst_40 : f32 to vector<16x1xf32>
    %44 = arith.divf %42, %43 : vector<16x1xf32>
    %45 = vector.broadcast %44 : vector<16x1xf32> to vector<16x32xf32>
    %46 = arith.subf %40, %45 : vector<16x32xf32>
    %47 = arith.mulf %46, %46 : vector<16x32xf32>
    %cst_41 = arith.constant dense<0.000000e+00> : vector<16xf32>
    %48 = vector.multi_reduction <add>, %47, %cst_41 [1] : vector<16x32xf32> to vector<16xf32>
    %49 = vector.shape_cast %48 : vector<16xf32> to vector<16x1xf32>
    %cst_42 = arith.constant 3.200000e+01 : f32
    %50 = vector.broadcast %cst_42 : f32 to vector<16x1xf32>
    %51 = arith.divf %49, %50 : vector<16x1xf32>
    %cst_43 = arith.constant 9.99999997E-7 : f32
    %52 = vector.broadcast %cst_43 : f32 to vector<16x1xf32>
    %53 = arith.addf %51, %52 : vector<16x1xf32>
    %54 = math.rsqrt %53 : vector<16x1xf32>
    %55 = vector.broadcast %54 : vector<16x1xf32> to vector<16x32xf32>
    %56 = arith.mulf %46, %55 : vector<16x32xf32>
    %c0_44 = arith.constant 0 : index
    %c0_45 = arith.constant 0 : index
    %57 = vector.load %arg9[%c0_44, %c0_45] : memref<1x32xf32, #tpu.memory_space<vmem>>, vector<1x32xf32>
    %58 = vector.broadcast %57 : vector<1x32xf32> to vector<16x32xf32>
    %59 = arith.mulf %56, %58 : vector<16x32xf32>
    %c0_46 = arith.constant 0 : index
    %c0_47 = arith.constant 0 : index
    %60 = vector.load %arg10[%c0_46, %c0_47] : memref<1x32xf32, #tpu.memory_space<vmem>>, vector<1x32xf32>
    %61 = vector.broadcast %60 : vector<1x32xf32> to vector<16x32xf32>
    %62 = arith.addf %59, %61 : vector<16x32xf32>
    %cst_48 = arith.constant 0.000000e+00 : f32
    %63 = vector.broadcast %cst_48 : f32 to vector<16x32xf32>
    %64 = arith.maximumf %62, %63 : vector<16x32xf32>
    %c32 = arith.constant 32 : index
    %c0_49 = arith.constant 0 : index
    %65 = vector.load %arg22[%c32, %c0_49] : memref<96x32xf32, #tpu.memory_space<vmem>>, vector<16x32xf32>
    tpu.vector_store %arg22[%c32, %c0_49], %64 {strides = array<i32>} : memref<96x32xf32, #tpu.memory_space<vmem>>, vector<16x32xf32>,
    %c12 = arith.constant 12 : index
    %c0_50 = arith.constant 0 : index
    %66 = vector.load %arg1[%c12, %c0_50] : memref<24x16xf32, #tpu.memory_space<vmem>>, vector<12x16xf32>
    %c21 = arith.constant 21 : index
    %c0_51 = arith.constant 0 : index
    %67 = vector.load %arg20[%c21, %c0_51] : memref<36x16xf32, #tpu.memory_space<vmem>>, vector<12x16xf32>
    tpu.vector_store %arg20[%c21, %c0_51], %66 {strides = array<i32>} : memref<36x16xf32, #tpu.memory_space<vmem>>, vector<12x16xf32>,
    %c19 = arith.constant 19 : index
    %c0_52 = arith.constant 0 : index
    %68 = vector.load %arg20[%c19, %c0_52] : memref<36x16xf32, #tpu.memory_space<vmem>>, vector<16x16xf32>
    %69 = math.absf %68 : vector<16x16xf32>
    %cst_53 = arith.constant dense<0.000000e+00> : vector<16xf32>
    %70 = vector.multi_reduction <add>, %69, %cst_53 [1] : vector<16x16xf32> to vector<16xf32>
    %71 = vector.shape_cast %70 : vector<16xf32> to vector<16x1xf32>
    %cst_54 = arith.constant 0.000000e+00 : f32
    %72 = vector.broadcast %cst_54 : f32 to vector<16x1xf32>
    %73 = arith.cmpf oeq, %71, %72 : vector<16x1xf32>
    %74 = vector.extract_strided_slice %2 {offsets = [16, 0], sizes = [16, 1], strides = [1, 1]} : vector<32x1xi1> to vector<16x1xi1>
    %75 = arith.andi %73, %74 : vector<16x1xi1>
    %cst_55 = arith.constant 9.99999997E-7 : f32
    %76 = vector.shape_cast %75 : vector<16x1xi1> to vector<16x1xi1>
    %77 = vector.broadcast %76 : vector<16x1xi1> to vector<16x16xi1>
    %78 = vector.broadcast %cst_55 : f32 to vector<16x16xf32>
    %79 = arith.select %77, %78, %68 : vector<16x16xi1>, vector<16x16xf32>
    %c19_56 = arith.constant 19 : index
    %c0_57 = arith.constant 0 : index
    %80 = vector.load %arg20[%c19_56, %c0_57] : memref<36x16xf32, #tpu.memory_space<vmem>>, vector<16x16xf32>
    tpu.vector_store %arg20[%c19_56, %c0_57], %79 {strides = array<i32>} : memref<36x16xf32, #tpu.memory_space<vmem>>, vector<16x16xf32>,
    %c18 = arith.constant 18 : index
    %c0_58 = arith.constant 0 : index
    %81 = vector.load %arg20[%c18, %c0_58] : memref<36x16xf32, #tpu.memory_space<vmem>>, vector<16x16xf32>
    %c0_59 = arith.constant 0 : index
    %c0_60 = arith.constant 0 : index
    %c0_61 = arith.constant 0 : index
    %82 = vector.load %arg5[%c0_59, %c0_60, %c0_61] : memref<3x16x32xf32, #tpu.memory_space<vmem>>, vector<1x16x32xf32>
    %83 = vector.shape_cast %82 : vector<1x16x32xf32> to vector<16x32xf32>
    %cst_62 = arith.constant dense<0.000000e+00> : vector<16x32xf32>
    %84 = tpu.matmul %81, %83, %cst_62 {dimension_numbers = #tpu.dot_dimension_numbers<[1], [0], [0], [1], [0, 0, 1, 1], [], []>} : vector<16x16xf32>, vector<16x32xf32>, vector<16x32xf32> -> vector<16x32xf32>
    %c19_63 = arith.constant 19 : index
    %c0_64 = arith.constant 0 : index
    %85 = vector.load %arg20[%c19_63, %c0_64] : memref<36x16xf32, #tpu.memory_space<vmem>>, vector<16x16xf32>
    %c1_65 = arith.constant 1 : index
    %c0_66 = arith.constant 0 : index
    %c0_67 = arith.constant 0 : index
    %86 = vector.load %arg5[%c1_65, %c0_66, %c0_67] : memref<3x16x32xf32, #tpu.memory_space<vmem>>, vector<1x16x32xf32>
    %87 = vector.shape_cast %86 : vector<1x16x32xf32> to vector<16x32xf32>
    %cst_68 = arith.constant dense<0.000000e+00> : vector<16x32xf32>
    %88 = tpu.matmul %85, %87, %cst_68 {dimension_numbers = #tpu.dot_dimension_numbers<[1], [0], [0], [1], [0, 0, 1, 1], [], []>} : vector<16x16xf32>, vector<16x32xf32>, vector<16x32xf32> -> vector<16x32xf32>
    %89 = arith.addf %84, %88 : vector<16x32xf32>
    %c20 = arith.constant 20 : index
    %c0_69 = arith.constant 0 : index
    %90 = vector.load %arg20[%c20, %c0_69] : memref<36x16xf32, #tpu.memory_space<vmem>>, vector<16x16xf32>
    %c2_70 = arith.constant 2 : index
    %c0_71 = arith.constant 0 : index
    %c0_72 = arith.constant 0 : index
    %91 = vector.load %arg5[%c2_70, %c0_71, %c0_72] : memref<3x16x32xf32, #tpu.memory_space<vmem>>, vector<1x16x32xf32>
    %92 = vector.shape_cast %91 : vector<1x16x32xf32> to vector<16x32xf32>
    %cst_73 = arith.constant dense<0.000000e+00> : vector<16x32xf32>
    %93 = tpu.matmul %90, %92, %cst_73 {dimension_numbers = #tpu.dot_dimension_numbers<[1], [0], [0], [1], [0, 0, 1, 1], [], []>} : vector<16x16xf32>, vector<16x32xf32>, vector<16x32xf32> -> vector<16x32xf32>
    %94 = arith.addf %89, %93 : vector<16x32xf32>
    %c0_74 = arith.constant 0 : index
    %c0_75 = arith.constant 0 : index
    %95 = vector.load %arg6[%c0_74, %c0_75] : memref<1x32xf32, #tpu.memory_space<vmem>>, vector<1x32xf32>
    %96 = vector.broadcast %95 : vector<1x32xf32> to vector<16x32xf32>
    %97 = arith.addf %94, %96 : vector<16x32xf32>
    %cst_76 = arith.constant dense<0.000000e+00> : vector<16xf32>
    %98 = vector.multi_reduction <add>, %97, %cst_76 [1] : vector<16x32xf32> to vector<16xf32>
    %99 = vector.shape_cast %98 : vector<16xf32> to vector<16x1xf32>
    %cst_77 = arith.constant 3.200000e+01 : f32
    %100 = vector.broadcast %cst_77 : f32 to vector<16x1xf32>
    %101 = arith.divf %99, %100 : vector<16x1xf32>
    %102 = vector.broadcast %101 : vector<16x1xf32> to vector<16x32xf32>
    %103 = arith.subf %97, %102 : vector<16x32xf32>
    %104 = arith.mulf %103, %103 : vector<16x32xf32>
    %cst_78 = arith.constant dense<0.000000e+00> : vector<16xf32>
    %105 = vector.multi_reduction <add>, %104, %cst_78 [1] : vector<16x32xf32> to vector<16xf32>
    %106 = vector.shape_cast %105 : vector<16xf32> to vector<16x1xf32>
    %cst_79 = arith.constant 3.200000e+01 : f32
    %107 = vector.broadcast %cst_79 : f32 to vector<16x1xf32>
    %108 = arith.divf %106, %107 : vector<16x1xf32>
    %cst_80 = arith.constant 9.99999997E-7 : f32
    %109 = vector.broadcast %cst_80 : f32 to vector<16x1xf32>
    %110 = arith.addf %108, %109 : vector<16x1xf32>
    %111 = math.rsqrt %110 : vector<16x1xf32>
    %112 = vector.broadcast %111 : vector<16x1xf32> to vector<16x32xf32>
    %113 = arith.mulf %103, %112 : vector<16x32xf32>
    %c0_81 = arith.constant 0 : index
    %c0_82 = arith.constant 0 : index
    %114 = vector.load %arg9[%c0_81, %c0_82] : memref<1x32xf32, #tpu.memory_space<vmem>>, vector<1x32xf32>
    %115 = vector.broadcast %114 : vector<1x32xf32> to vector<16x32xf32>
    %116 = arith.mulf %113, %115 : vector<16x32xf32>
    %c0_83 = arith.constant 0 : index
    %c0_84 = arith.constant 0 : index
    %117 = vector.load %arg10[%c0_83, %c0_84] : memref<1x32xf32, #tpu.memory_space<vmem>>, vector<1x32xf32>
    %118 = vector.broadcast %117 : vector<1x32xf32> to vector<16x32xf32>
    %119 = arith.addf %116, %118 : vector<16x32xf32>
    %cst_85 = arith.constant 0.000000e+00 : f32
    %120 = vector.broadcast %cst_85 : f32 to vector<16x32xf32>
    %121 = arith.maximumf %119, %120 : vector<16x32xf32>
    %c48 = arith.constant 48 : index
    %c0_86 = arith.constant 0 : index
    %122 = vector.load %arg22[%c48, %c0_86] : memref<96x32xf32, #tpu.memory_space<vmem>>, vector<16x32xf32>
    tpu.vector_store %arg22[%c48, %c0_86], %121 {strides = array<i32>} : memref<96x32xf32, #tpu.memory_space<vmem>>, vector<16x32xf32>,
    %cst_87 = arith.constant 0.000000e+00 : f32
    %123 = vector.broadcast %cst_87 : f32 to vector<36x16xf32>
    %c0_88 = arith.constant 0 : index
    %c0_89 = arith.constant 0 : index
    %124 = vector.load %arg21[%c0_88, %c0_89] : memref<36x16xf32, #tpu.memory_space<vmem>>, vector<36x16xf32>
    tpu.vector_store %arg21[%c0_88, %c0_89], %123 {strides = array<i32>} : memref<36x16xf32, #tpu.memory_space<vmem>>, vector<36x16xf32>,
    %c0_90 = arith.constant 0 : index
    %c0_91 = arith.constant 0 : index
    %125 = vector.load %arg2[%c0_90, %c0_91] : memref<24x16xf32, #tpu.memory_space<vmem>>, vector<12x16xf32>
    %c3_92 = arith.constant 3 : index
    %c0_93 = arith.constant 0 : index
    %126 = vector.load %arg21[%c3_92, %c0_93] : memref<36x16xf32, #tpu.memory_space<vmem>>, vector<12x16xf32>
    tpu.vector_store %arg21[%c3_92, %c0_93], %125 {strides = array<i32>} : memref<36x16xf32, #tpu.memory_space<vmem>>, vector<12x16xf32>,
    %c1_94 = arith.constant 1 : index
    %c0_95 = arith.constant 0 : index
    %127 = vector.load %arg21[%c1_94, %c0_95] : memref<36x16xf32, #tpu.memory_space<vmem>>, vector<16x16xf32>
    %128 = math.absf %127 : vector<16x16xf32>
    %cst_96 = arith.constant dense<0.000000e+00> : vector<16xf32>
    %129 = vector.multi_reduction <add>, %128, %cst_96 [1] : vector<16x16xf32> to vector<16xf32>
    %130 = vector.shape_cast %129 : vector<16xf32> to vector<16x1xf32>
    %cst_97 = arith.constant 0.000000e+00 : f32
    %131 = vector.broadcast %cst_97 : f32 to vector<16x1xf32>
    %132 = arith.cmpf oeq, %130, %131 : vector<16x1xf32>
    %133 = vector.extract_strided_slice %2 {offsets = [0, 0], sizes = [16, 1], strides = [1, 1]} : vector<32x1xi1> to vector<16x1xi1>
    %134 = arith.andi %132, %133 : vector<16x1xi1>
    %cst_98 = arith.constant 9.99999997E-7 : f32
    %135 = vector.shape_cast %134 : vector<16x1xi1> to vector<16x1xi1>
    %136 = vector.broadcast %135 : vector<16x1xi1> to vector<16x16xi1>
    %137 = vector.broadcast %cst_98 : f32 to vector<16x16xf32>
    %138 = arith.select %136, %137, %127 : vector<16x16xi1>, vector<16x16xf32>
    %c1_99 = arith.constant 1 : index
    %c0_100 = arith.constant 0 : index
    %139 = vector.load %arg21[%c1_99, %c0_100] : memref<36x16xf32, #tpu.memory_space<vmem>>, vector<16x16xf32>
    tpu.vector_store %arg21[%c1_99, %c0_100], %138 {strides = array<i32>} : memref<36x16xf32, #tpu.memory_space<vmem>>, vector<16x16xf32>,
    %c0_101 = arith.constant 0 : index
    %c0_102 = arith.constant 0 : index
    %140 = vector.load %arg21[%c0_101, %c0_102] : memref<36x16xf32, #tpu.memory_space<vmem>>, vector<16x16xf32>
    %c0_103 = arith.constant 0 : index
    %c0_104 = arith.constant 0 : index
    %c0_105 = arith.constant 0 : index
    %141 = vector.load %arg7[%c0_103, %c0_104, %c0_105] : memref<3x16x32xf32, #tpu.memory_space<vmem>>, vector<1x16x32xf32>
    %142 = vector.shape_cast %141 : vector<1x16x32xf32> to vector<16x32xf32>
    %cst_106 = arith.constant dense<0.000000e+00> : vector<16x32xf32>
    %143 = tpu.matmul %140, %142, %cst_106 {dimension_numbers = #tpu.dot_dimension_numbers<[1], [0], [0], [1], [0, 0, 1, 1], [], []>} : vector<16x16xf32>, vector<16x32xf32>, vector<16x32xf32> -> vector<16x32xf32>
    %c1_107 = arith.constant 1 : index
    %c0_108 = arith.constant 0 : index
    %144 = vector.load %arg21[%c1_107, %c0_108] : memref<36x16xf32, #tpu.memory_space<vmem>>, vector<16x16xf32>
    %c1_109 = arith.constant 1 : index
    %c0_110 = arith.constant 0 : index
    %c0_111 = arith.constant 0 : index
    %145 = vector.load %arg7[%c1_109, %c0_110, %c0_111] : memref<3x16x32xf32, #tpu.memory_space<vmem>>, vector<1x16x32xf32>
    %146 = vector.shape_cast %145 : vector<1x16x32xf32> to vector<16x32xf32>
    %cst_112 = arith.constant dense<0.000000e+00> : vector<16x32xf32>
    %147 = tpu.matmul %144, %146, %cst_112 {dimension_numbers = #tpu.dot_dimension_numbers<[1], [0], [0], [1], [0, 0, 1, 1], [], []>} : vector<16x16xf32>, vector<16x32xf32>, vector<16x32xf32> -> vector<16x32xf32>
    %148 = arith.addf %143, %147 : vector<16x32xf32>
    %c2_113 = arith.constant 2 : index
    %c0_114 = arith.constant 0 : index
    %149 = vector.load %arg21[%c2_113, %c0_114] : memref<36x16xf32, #tpu.memory_space<vmem>>, vector<16x16xf32>
    %c2_115 = arith.constant 2 : index
    %c0_116 = arith.constant 0 : index
    %c0_117 = arith.constant 0 : index
    %150 = vector.load %arg7[%c2_115, %c0_116, %c0_117] : memref<3x16x32xf32, #tpu.memory_space<vmem>>, vector<1x16x32xf32>
    %151 = vector.shape_cast %150 : vector<1x16x32xf32> to vector<16x32xf32>
    %cst_118 = arith.constant dense<0.000000e+00> : vector<16x32xf32>
    %152 = tpu.matmul %149, %151, %cst_118 {dimension_numbers = #tpu.dot_dimension_numbers<[1], [0], [0], [1], [0, 0, 1, 1], [], []>} : vector<16x16xf32>, vector<16x32xf32>, vector<16x32xf32> -> vector<16x32xf32>
    %153 = arith.addf %148, %152 : vector<16x32xf32>
    %c0_119 = arith.constant 0 : index
    %c0_120 = arith.constant 0 : index
    %154 = vector.load %arg8[%c0_119, %c0_120] : memref<1x32xf32, #tpu.memory_space<vmem>>, vector<1x32xf32>
    %155 = vector.broadcast %154 : vector<1x32xf32> to vector<16x32xf32>
    %156 = arith.addf %153, %155 : vector<16x32xf32>
    %cst_121 = arith.constant dense<0.000000e+00> : vector<16xf32>
    %157 = vector.multi_reduction <add>, %156, %cst_121 [1] : vector<16x32xf32> to vector<16xf32>
    %158 = vector.shape_cast %157 : vector<16xf32> to vector<16x1xf32>
    %cst_122 = arith.constant 3.200000e+01 : f32
    %159 = vector.broadcast %cst_122 : f32 to vector<16x1xf32>
    %160 = arith.divf %158, %159 : vector<16x1xf32>
    %161 = vector.broadcast %160 : vector<16x1xf32> to vector<16x32xf32>
    %162 = arith.subf %156, %161 : vector<16x32xf32>
    %163 = arith.mulf %162, %162 : vector<16x32xf32>
    %cst_123 = arith.constant dense<0.000000e+00> : vector<16xf32>
    %164 = vector.multi_reduction <add>, %163, %cst_123 [1] : vector<16x32xf32> to vector<16xf32>
    %165 = vector.shape_cast %164 : vector<16xf32> to vector<16x1xf32>
    %cst_124 = arith.constant 3.200000e+01 : f32
    %166 = vector.broadcast %cst_124 : f32 to vector<16x1xf32>
    %167 = arith.divf %165, %166 : vector<16x1xf32>
    %cst_125 = arith.constant 9.99999997E-7 : f32
    %168 = vector.broadcast %cst_125 : f32 to vector<16x1xf32>
    %169 = arith.addf %167, %168 : vector<16x1xf32>
    %170 = math.rsqrt %169 : vector<16x1xf32>
    %171 = vector.broadcast %170 : vector<16x1xf32> to vector<16x32xf32>
    %172 = arith.mulf %162, %171 : vector<16x32xf32>
    %c0_126 = arith.constant 0 : index
    %c0_127 = arith.constant 0 : index
    %173 = vector.load %arg11[%c0_126, %c0_127] : memref<1x32xf32, #tpu.memory_space<vmem>>, vector<1x32xf32>
    %174 = vector.broadcast %173 : vector<1x32xf32> to vector<16x32xf32>
    %175 = arith.mulf %172, %174 : vector<16x32xf32>
    %c0_128 = arith.constant 0 : index
    %c0_129 = arith.constant 0 : index
    %176 = vector.load %arg12[%c0_128, %c0_129] : memref<1x32xf32, #tpu.memory_space<vmem>>, vector<1x32xf32>
    %177 = vector.broadcast %176 : vector<1x32xf32> to vector<16x32xf32>
    %178 = arith.addf %175, %177 : vector<16x32xf32>
    %cst_130 = arith.constant 0.000000e+00 : f32
    %179 = vector.broadcast %cst_130 : f32 to vector<16x32xf32>
    %180 = arith.maximumf %178, %179 : vector<16x32xf32>
    %c64 = arith.constant 64 : index
    %c0_131 = arith.constant 0 : index
    %181 = vector.load %arg22[%c64, %c0_131] : memref<96x32xf32, #tpu.memory_space<vmem>>, vector<16x32xf32>
    tpu.vector_store %arg22[%c64, %c0_131], %180 {strides = array<i32>} : memref<96x32xf32, #tpu.memory_space<vmem>>, vector<16x32xf32>,
    %c12_132 = arith.constant 12 : index
    %c0_133 = arith.constant 0 : index
    %182 = vector.load %arg2[%c12_132, %c0_133] : memref<24x16xf32, #tpu.memory_space<vmem>>, vector<12x16xf32>
    %c21_134 = arith.constant 21 : index
    %c0_135 = arith.constant 0 : index
    %183 = vector.load %arg21[%c21_134, %c0_135] : memref<36x16xf32, #tpu.memory_space<vmem>>, vector<12x16xf32>
    tpu.vector_store %arg21[%c21_134, %c0_135], %182 {strides = array<i32>} : memref<36x16xf32, #tpu.memory_space<vmem>>, vector<12x16xf32>,
    %c19_136 = arith.constant 19 : index
    %c0_137 = arith.constant 0 : index
    %184 = vector.load %arg21[%c19_136, %c0_137] : memref<36x16xf32, #tpu.memory_space<vmem>>, vector<16x16xf32>
    %185 = math.absf %184 : vector<16x16xf32>
    %cst_138 = arith.constant dense<0.000000e+00> : vector<16xf32>
    %186 = vector.multi_reduction <add>, %185, %cst_138 [1] : vector<16x16xf32> to vector<16xf32>
    %187 = vector.shape_cast %186 : vector<16xf32> to vector<16x1xf32>
    %cst_139 = arith.constant 0.000000e+00 : f32
    %188 = vector.broadcast %cst_139 : f32 to vector<16x1xf32>
    %189 = arith.cmpf oeq, %187, %188 : vector<16x1xf32>
    %190 = vector.extract_strided_slice %2 {offsets = [16, 0], sizes = [16, 1], strides = [1, 1]} : vector<32x1xi1> to vector<16x1xi1>
    %191 = arith.andi %189, %190 : vector<16x1xi1>
    %cst_140 = arith.constant 9.99999997E-7 : f32
    %192 = vector.shape_cast %191 : vector<16x1xi1> to vector<16x1xi1>
    %193 = vector.broadcast %192 : vector<16x1xi1> to vector<16x16xi1>
    %194 = vector.broadcast %cst_140 : f32 to vector<16x16xf32>
    %195 = arith.select %193, %194, %184 : vector<16x16xi1>, vector<16x16xf32>
    %c19_141 = arith.constant 19 : index
    %c0_142 = arith.constant 0 : index
    %196 = vector.load %arg21[%c19_141, %c0_142] : memref<36x16xf32, #tpu.memory_space<vmem>>, vector<16x16xf32>
    tpu.vector_store %arg21[%c19_141, %c0_142], %195 {strides = array<i32>} : memref<36x16xf32, #tpu.memory_space<vmem>>, vector<16x16xf32>,
    %c18_143 = arith.constant 18 : index
    %c0_144 = arith.constant 0 : index
    %197 = vector.load %arg21[%c18_143, %c0_144] : memref<36x16xf32, #tpu.memory_space<vmem>>, vector<16x16xf32>
    %c0_145 = arith.constant 0 : index
    %c0_146 = arith.constant 0 : index
    %c0_147 = arith.constant 0 : index
    %198 = vector.load %arg7[%c0_145, %c0_146, %c0_147] : memref<3x16x32xf32, #tpu.memory_space<vmem>>, vector<1x16x32xf32>
    %199 = vector.shape_cast %198 : vector<1x16x32xf32> to vector<16x32xf32>
    %cst_148 = arith.constant dense<0.000000e+00> : vector<16x32xf32>
    %200 = tpu.matmul %197, %199, %cst_148 {dimension_numbers = #tpu.dot_dimension_numbers<[1], [0], [0], [1], [0, 0, 1, 1], [], []>} : vector<16x16xf32>, vector<16x32xf32>, vector<16x32xf32> -> vector<16x32xf32>
    %c19_149 = arith.constant 19 : index
    %c0_150 = arith.constant 0 : index
    %201 = vector.load %arg21[%c19_149, %c0_150] : memref<36x16xf32, #tpu.memory_space<vmem>>, vector<16x16xf32>
    %c1_151 = arith.constant 1 : index
    %c0_152 = arith.constant 0 : index
    %c0_153 = arith.constant 0 : index
    %202 = vector.load %arg7[%c1_151, %c0_152, %c0_153] : memref<3x16x32xf32, #tpu.memory_space<vmem>>, vector<1x16x32xf32>
    %203 = vector.shape_cast %202 : vector<1x16x32xf32> to vector<16x32xf32>
    %cst_154 = arith.constant dense<0.000000e+00> : vector<16x32xf32>
    %204 = tpu.matmul %201, %203, %cst_154 {dimension_numbers = #tpu.dot_dimension_numbers<[1], [0], [0], [1], [0, 0, 1, 1], [], []>} : vector<16x16xf32>, vector<16x32xf32>, vector<16x32xf32> -> vector<16x32xf32>
    %205 = arith.addf %200, %204 : vector<16x32xf32>
    %c20_155 = arith.constant 20 : index
    %c0_156 = arith.constant 0 : index
    %206 = vector.load %arg21[%c20_155, %c0_156] : memref<36x16xf32, #tpu.memory_space<vmem>>, vector<16x16xf32>
    %c2_157 = arith.constant 2 : index
    %c0_158 = arith.constant 0 : index
    %c0_159 = arith.constant 0 : index
    %207 = vector.load %arg7[%c2_157, %c0_158, %c0_159] : memref<3x16x32xf32, #tpu.memory_space<vmem>>, vector<1x16x32xf32>
    %208 = vector.shape_cast %207 : vector<1x16x32xf32> to vector<16x32xf32>
    %cst_160 = arith.constant dense<0.000000e+00> : vector<16x32xf32>
    %209 = tpu.matmul %206, %208, %cst_160 {dimension_numbers = #tpu.dot_dimension_numbers<[1], [0], [0], [1], [0, 0, 1, 1], [], []>} : vector<16x16xf32>, vector<16x32xf32>, vector<16x32xf32> -> vector<16x32xf32>
    %210 = arith.addf %205, %209 : vector<16x32xf32>
    %c0_161 = arith.constant 0 : index
    %c0_162 = arith.constant 0 : index
    %211 = vector.load %arg8[%c0_161, %c0_162] : memref<1x32xf32, #tpu.memory_space<vmem>>, vector<1x32xf32>
    %212 = vector.broadcast %211 : vector<1x32xf32> to vector<16x32xf32>
    %213 = arith.addf %210, %212 : vector<16x32xf32>
    %cst_163 = arith.constant dense<0.000000e+00> : vector<16xf32>
    %214 = vector.multi_reduction <add>, %213, %cst_163 [1] : vector<16x32xf32> to vector<16xf32>
    %215 = vector.shape_cast %214 : vector<16xf32> to vector<16x1xf32>
    %cst_164 = arith.constant 3.200000e+01 : f32
    %216 = vector.broadcast %cst_164 : f32 to vector<16x1xf32>
    %217 = arith.divf %215, %216 : vector<16x1xf32>
    %218 = vector.broadcast %217 : vector<16x1xf32> to vector<16x32xf32>
    %219 = arith.subf %213, %218 : vector<16x32xf32>
    %220 = arith.mulf %219, %219 : vector<16x32xf32>
    %cst_165 = arith.constant dense<0.000000e+00> : vector<16xf32>
    %221 = vector.multi_reduction <add>, %220, %cst_165 [1] : vector<16x32xf32> to vector<16xf32>
    %222 = vector.shape_cast %221 : vector<16xf32> to vector<16x1xf32>
    %cst_166 = arith.constant 3.200000e+01 : f32
    %223 = vector.broadcast %cst_166 : f32 to vector<16x1xf32>
    %224 = arith.divf %222, %223 : vector<16x1xf32>
    %cst_167 = arith.constant 9.99999997E-7 : f32
    %225 = vector.broadcast %cst_167 : f32 to vector<16x1xf32>
    %226 = arith.addf %224, %225 : vector<16x1xf32>
    %227 = math.rsqrt %226 : vector<16x1xf32>
    %228 = vector.broadcast %227 : vector<16x1xf32> to vector<16x32xf32>
    %229 = arith.mulf %219, %228 : vector<16x32xf32>
    %c0_168 = arith.constant 0 : index
    %c0_169 = arith.constant 0 : index
    %230 = vector.load %arg11[%c0_168, %c0_169] : memref<1x32xf32, #tpu.memory_space<vmem>>, vector<1x32xf32>
    %231 = vector.broadcast %230 : vector<1x32xf32> to vector<16x32xf32>
    %232 = arith.mulf %229, %231 : vector<16x32xf32>
    %c0_170 = arith.constant 0 : index
    %c0_171 = arith.constant 0 : index
    %233 = vector.load %arg12[%c0_170, %c0_171] : memref<1x32xf32, #tpu.memory_space<vmem>>, vector<1x32xf32>
    %234 = vector.broadcast %233 : vector<1x32xf32> to vector<16x32xf32>
    %235 = arith.addf %232, %234 : vector<16x32xf32>
    %cst_172 = arith.constant 0.000000e+00 : f32
    %236 = vector.broadcast %cst_172 : f32 to vector<16x32xf32>
    %237 = arith.maximumf %235, %236 : vector<16x32xf32>
    %c80 = arith.constant 80 : index
    %c0_173 = arith.constant 0 : index
    %238 = vector.load %arg22[%c80, %c0_173] : memref<96x32xf32, #tpu.memory_space<vmem>>, vector<16x32xf32>
    tpu.vector_store %arg22[%c80, %c0_173], %237 {strides = array<i32>} : memref<96x32xf32, #tpu.memory_space<vmem>>, vector<16x32xf32>,
    %c0_174 = arith.constant 0 : index
    %c0_175 = arith.constant 0 : index
    %239 = vector.load %arg22[%c0_174, %c0_175] : memref<96x32xf32, #tpu.memory_space<vmem>>, vector<96x32xf32>
    %c0_176 = arith.constant 0 : index
    %c0_177 = arith.constant 0 : index
    %240 = vector.load %arg13[%c0_176, %c0_177] : memref<32x32xf32, #tpu.memory_space<vmem>>, vector<32x32xf32>
    %cst_178 = arith.constant dense<0.000000e+00> : vector<96x32xf32>
    %241 = tpu.matmul %239, %240, %cst_178 {dimension_numbers = #tpu.dot_dimension_numbers<[1], [0], [0], [1], [0, 0, 1, 1], [], []>} : vector<96x32xf32>, vector<32x32xf32>, vector<96x32xf32> -> vector<96x32xf32>
    %cst_179 = arith.constant 0.000000e+00 : f32
    %242 = vector.broadcast %cst_179 : f32 to vector<96x32xf32>
    %243 = arith.maximumf %241, %242 : vector<96x32xf32>
    %244 = vector.extract_strided_slice %243 {offsets = [0, 0], sizes = [32, 32], strides = [1, 1]} : vector<96x32xf32> to vector<32x32xf32>
    %245 = vector.extract_strided_slice %243 {offsets = [32, 0], sizes = [32, 32], strides = [1, 1]} : vector<96x32xf32> to vector<32x32xf32>
    %246 = vector.extract_strided_slice %243 {offsets = [64, 0], sizes = [32, 32], strides = [1, 1]} : vector<96x32xf32> to vector<32x32xf32>
    %c0_180 = arith.constant 0 : index
    %c0_181 = arith.constant 0 : index
    %247 = vector.load %arg15[%c0_180, %c0_181] : memref<8x32xf32, #tpu.memory_space<vmem>>, vector<8x32xf32>
    %cst_182 = arith.constant 0.000000e+00 : f32
    %248 = vector.broadcast %cst_182 : f32 to vector<8x32xf32>
    %c0_183 = arith.constant 0 : index
    %249 = memref.load %arg14[%c0_183] : memref<9xf32, #tpu.memory_space<smem>>
    %250 = vector.broadcast %249 : f32 to vector<32x32xf32>
    %251 = arith.mulf %250, %244 : vector<32x32xf32>
    %c3_184 = arith.constant 3 : index
    %252 = memref.load %arg14[%c3_184] : memref<9xf32, #tpu.memory_space<smem>>
    %253 = vector.broadcast %252 : f32 to vector<32x32xf32>
    %254 = arith.mulf %253, %245 : vector<32x32xf32>
    %255 = arith.addf %251, %254 : vector<32x32xf32>
    %c6 = arith.constant 6 : index
    %256 = memref.load %arg14[%c6] : memref<9xf32, #tpu.memory_space<smem>>
    %257 = vector.broadcast %256 : f32 to vector<32x32xf32>
    %258 = arith.mulf %257, %246 : vector<32x32xf32>
    %259 = arith.addf %255, %258 : vector<32x32xf32>
    %cst_185 = arith.constant 0.000000e+00 : f32
    %260 = vector.broadcast %cst_185 : f32 to vector<32x32xf32>
    %261 = arith.maximumf %259, %260 : vector<32x32xf32>
    %cst_186 = arith.constant dense<0.000000e+00> : vector<8x32xf32>
    %262 = tpu.matmul %247, %261, %cst_186 {dimension_numbers = #tpu.dot_dimension_numbers<[1], [0], [0], [1], [0, 0, 1, 1], [], []>} : vector<8x32xf32>, vector<32x32xf32>, vector<8x32xf32> -> vector<8x32xf32>
    %cst_187 = arith.constant 0.000000e+00 : f32
    %263 = vector.broadcast %cst_187 : f32 to vector<8x32xf32>
    %264 = arith.maximumf %262, %263 : vector<8x32xf32>
    %265 = arith.addf %248, %264 : vector<8x32xf32>
    %c1_188 = arith.constant 1 : index
    %266 = memref.load %arg14[%c1_188] : memref<9xf32, #tpu.memory_space<smem>>
    %267 = vector.broadcast %266 : f32 to vector<32x32xf32>
    %268 = arith.mulf %267, %244 : vector<32x32xf32>
    %c4 = arith.constant 4 : index
    %269 = memref.load %arg14[%c4] : memref<9xf32, #tpu.memory_space<smem>>
    %270 = vector.broadcast %269 : f32 to vector<32x32xf32>
    %271 = arith.mulf %270, %245 : vector<32x32xf32>
    %272 = arith.addf %268, %271 : vector<32x32xf32>
    %c7 = arith.constant 7 : index
    %273 = memref.load %arg14[%c7] : memref<9xf32, #tpu.memory_space<smem>>
    %274 = vector.broadcast %273 : f32 to vector<32x32xf32>
    %275 = arith.mulf %274, %246 : vector<32x32xf32>
    %276 = arith.addf %272, %275 : vector<32x32xf32>
    %cst_189 = arith.constant 0.000000e+00 : f32
    %277 = vector.broadcast %cst_189 : f32 to vector<32x32xf32>
    %278 = arith.maximumf %276, %277 : vector<32x32xf32>
    %cst_190 = arith.constant dense<0.000000e+00> : vector<8x32xf32>
    %279 = tpu.matmul %247, %278, %cst_190 {dimension_numbers = #tpu.dot_dimension_numbers<[1], [0], [0], [1], [0, 0, 1, 1], [], []>} : vector<8x32xf32>, vector<32x32xf32>, vector<8x32xf32> -> vector<8x32xf32>
    %cst_191 = arith.constant 0.000000e+00 : f32
    %280 = vector.broadcast %cst_191 : f32 to vector<8x32xf32>
    %281 = arith.maximumf %279, %280 : vector<8x32xf32>
    %282 = arith.addf %265, %281 : vector<8x32xf32>
    %c2_192 = arith.constant 2 : index
    %283 = memref.load %arg14[%c2_192] : memref<9xf32, #tpu.memory_space<smem>>
    %284 = vector.broadcast %283 : f32 to vector<32x32xf32>
    %285 = arith.mulf %284, %244 : vector<32x32xf32>
    %c5 = arith.constant 5 : index
    %286 = memref.load %arg14[%c5] : memref<9xf32, #tpu.memory_space<smem>>
    %287 = vector.broadcast %286 : f32 to vector<32x32xf32>
    %288 = arith.mulf %287, %245 : vector<32x32xf32>
    %289 = arith.addf %285, %288 : vector<32x32xf32>
    %c8 = arith.constant 8 : index
    %290 = memref.load %arg14[%c8] : memref<9xf32, #tpu.memory_space<smem>>
    %291 = vector.broadcast %290 : f32 to vector<32x32xf32>
    %292 = arith.mulf %291, %246 : vector<32x32xf32>
    %293 = arith.addf %289, %292 : vector<32x32xf32>
    %cst_193 = arith.constant 0.000000e+00 : f32
    %294 = vector.broadcast %cst_193 : f32 to vector<32x32xf32>
    %295 = arith.maximumf %293, %294 : vector<32x32xf32>
    %cst_194 = arith.constant dense<0.000000e+00> : vector<8x32xf32>
    %296 = tpu.matmul %247, %295, %cst_194 {dimension_numbers = #tpu.dot_dimension_numbers<[1], [0], [0], [1], [0, 0, 1, 1], [], []>} : vector<8x32xf32>, vector<32x32xf32>, vector<8x32xf32> -> vector<8x32xf32>
    %cst_195 = arith.constant 0.000000e+00 : f32
    %297 = vector.broadcast %cst_195 : f32 to vector<8x32xf32>
    %298 = arith.maximumf %296, %297 : vector<8x32xf32>
    %299 = arith.addf %282, %298 : vector<8x32xf32>
    %c0_196 = arith.constant 0 : index
    %c0_197 = arith.constant 0 : index
    %300 = vector.load %arg16[%c0_196, %c0_197] : memref<2x8xf32, #tpu.memory_space<vmem>>, vector<2x8xf32>
    %cst_198 = arith.constant dense<0.000000e+00> : vector<2x32xf32>
    %301 = tpu.matmul %300, %299, %cst_198 {dimension_numbers = #tpu.dot_dimension_numbers<[1], [0], [0], [1], [0, 0, 1, 1], [], []>} : vector<2x8xf32>, vector<8x32xf32>, vector<2x32xf32> -> vector<2x32xf32>
    %c0_199 = arith.constant 0 : index
    %c0_200 = arith.constant 0 : index
    %302 = vector.load %arg17[%c0_199, %c0_200] : memref<32x3xf32, #tpu.memory_space<vmem>>, vector<32x3xf32>
    %cst_201 = arith.constant dense<0.000000e+00> : vector<2x3xf32>
    %303 = tpu.matmul %301, %302, %cst_201 {dimension_numbers = #tpu.dot_dimension_numbers<[1], [0], [0], [1], [0, 0, 1, 1], [], []>} : vector<2x32xf32>, vector<32x3xf32>, vector<2x3xf32> -> vector<2x3xf32>
    %c0_202 = arith.constant 0 : index
    %c0_203 = arith.constant 0 : index
    %304 = vector.load %arg18[%c0_202, %c0_203] : memref<1x3xf32, #tpu.memory_space<vmem>>, vector<1x3xf32>
    %305 = vector.broadcast %304 : vector<1x3xf32> to vector<2x3xf32>
    %306 = arith.addf %303, %305 : vector<2x3xf32>
    %c0_204 = arith.constant 0 : index
    %c0_205 = arith.constant 0 : index
    %307 = vector.load %arg19[%c0_204, %c0_205] : memref<2x3xf32, #tpu.memory_space<vmem>>, vector<2x3xf32>
    tpu.vector_store %arg19[%c0_204, %c0_205], %306 {strides = array<i32>} : memref<2x3xf32, #tpu.memory_space<vmem>>, vector<2x3xf32>,
    return
  }
}

</mosaic_0001>

<llo_original>
// kernel: model_forward.1
$region0: #{model_forward.1}
  #allocation0 [shape = 'u32[]', space=smem, size = 0x4, offset = 0x4, fixed_abs, tag = 'smem constant byte address 0x4 - core index']
  #allocation1 [shape = 'u32[144,128]{1,0:T(1,128)}', space=vmem, size = 0x12000, scoped, tag = 'internal scratch']
  #allocation2 [shape = 'f32[36,16]{1,0:T(8,128)}', space=vmem, size = 0x5000, scoped, tag = 'scratch operand']
  #allocation3 [shape = 'f32[36,16]{1,0:T(8,128)}', space=vmem, size = 0x5000, scoped, tag = 'scratch operand']
  #allocation4 [shape = 'f32[96,32]{1,0:T(8,128)}', space=vmem, size = 0xc000, scoped, tag = 'scratch operand']
  %s0 = inlined_call_operand.vmem [shape: f32[32,32], index: 0, kind: input, shape index: {}]
  %s1 = inlined_call_operand.vmem [shape: f32[24,16], index: 1, kind: input, shape index: {}]
  %s2 = inlined_call_operand.vmem [shape: f32[24,16], index: 2, kind: input, shape index: {}]
  %s3 = inlined_call_operand.vmem [shape: f32[32,1], index: 3, kind: input, shape index: {}]
  %s4 = inlined_call_operand.vmem [shape: f32[32,32], index: 4, kind: input, shape index: {}]
  %s5 = inlined_call_operand.vmem [shape: f32[3,16,32], index: 5, kind: input, shape index: {}]
  %s6 = inlined_call_operand.vmem [shape: f32[1,32], index: 6, kind: input, shape index: {}]
  %s7 = inlined_call_operand.vmem [shape: f32[3,16,32], index: 7, kind: input, shape index: {}]
  %s8 = inlined_call_operand.vmem [shape: f32[1,32], index: 8, kind: input, shape index: {}]
  %s9 = inlined_call_operand.vmem [shape: f32[1,32], index: 9, kind: input, shape index: {}]
  %s10 = inlined_call_operand.vmem [shape: f32[1,32], index: 10, kind: input, shape index: {}]
  %s11 = inlined_call_operand.vmem [shape: f32[1,32], index: 11, kind: input, shape index: {}]
  %s12 = inlined_call_operand.vmem [shape: f32[1,32], index: 12, kind: input, shape index: {}]
  %s13 = inlined_call_operand.vmem [shape: f32[32,32], index: 13, kind: input, shape index: {}]
  %s14 = inlined_call_operand.vmem [shape: f32[9], index: 14, kind: input, shape index: {}]
  %s15 = inlined_call_operand.vmem [shape: f32[8,32], index: 15, kind: input, shape index: {}]
  %s16 = inlined_call_operand.vmem [shape: f32[2,8], index: 16, kind: input, shape index: {}]
  %s17 = inlined_call_operand.vmem [shape: f32[32,3], index: 17, kind: input, shape index: {}]
  %s18 = inlined_call_operand.vmem [shape: f32[1,3], index: 18, kind: input, shape index: {}]
  %s19 = inlined_call_operand.hbm [shape: f32[2,3], index: 19, kind: output, shape index: {}]
  %s20 = sld [smem:[#allocation0]]
  $region90: #{model_forward.1} parent=0
    _
  %s22 = ssub.s32 1, %s20
  %s23 = scalar_select 0, %s22, %s20
  $region1: #{model_forward.1} parent=0
    #allocation5 [shape = 'u8[512]{0}', space=smem, size = 0x200, scoped, tag = 'input window, operand 14, single buffered']
    #allocation6 [shape = 's32[1]{0}', space=sflag, size = 0x4, scoped, tag = 'scoped memory for model_forward.1']
    #allocation7 [shape = 's32[1]{0}', space=sflag, size = 0x4, scoped, tag = 'scoped memory for model_forward.1']
    #allocation8 [shape = 'u8[1024]{0}', space=vmem, size = 0x400, scoped, tag = 'output window, operand 0, single buffered']
    %24 = vsyncpa [#allocation7], 0
    %25 = vsyncpa [#allocation6], 0
    // Predicated region
    $region2: #{model_forward.1} parent=1 // pred_check
      _
    $region3: #{model_forward.1} parent=1 // pred_check_branch
      %27 = sbr.rel (0) target = $region5
    $region4: #{model_forward.1} parent=1 // pred_region
      _
    $region5: #{model_forward.1} parent=1 // pred_fallthru
      _
    // Predicated region
    $region6: #{model_forward.1} parent=1 // pred_check
      _
    $region7: #{model_forward.1} parent=1 // pred_check_branch
      %29 = sbr.rel (0) target = $region9
    $region8: #{model_forward.1} parent=1 // pred_region
      _
    $region9: #{model_forward.1} parent=1 // pred_fallthru
      _
    // Predicated region
    $region10: #{model_forward.1} parent=1 // pred_check
      _
    $region11: #{model_forward.1} parent=1 // pred_check_branch
      %31 = sbr.rel (0) target = $region13
    $region12: #{model_forward.1} parent=1 // pred_region
      _
    $region13: #{model_forward.1} parent=1 // pred_fallthru
      _
    // Predicated region
    $region14: #{model_forward.1} parent=1 // pred_check
      _
    $region15: #{model_forward.1} parent=1 // pred_check_branch
      %33 = sbr.rel (0) target = $region17
    $region16: #{model_forward.1} parent=1 // pred_region
      _
    $region17: #{model_forward.1} parent=1 // pred_fallthru
      _
    // Predicated region
    $region18: #{model_forward.1} parent=1 // pred_check
      _
    $region19: #{model_forward.1} parent=1 // pred_check_branch
      %35 = sbr.rel (0) target = $region21
    $region20: #{model_forward.1} parent=1 // pred_region
      _
    $region21: #{model_forward.1} parent=1 // pred_fallthru
      _
    // Predicated region
    $region22: #{model_forward.1} parent=1 // pred_check
      _
    $region23: #{model_forward.1} parent=1 // pred_check_branch
      %37 = sbr.rel (0) target = $region25
    $region24: #{model_forward.1} parent=1 // pred_region
      _
    $region25: #{model_forward.1} parent=1 // pred_fallthru
      _
    // Predicated region
    $region26: #{model_forward.1} parent=1 // pred_check
      _
    $region27: #{model_forward.1} parent=1 // pred_check_branch
      %39 = sbr.rel (0) target = $region29
    $region28: #{model_forward.1} parent=1 // pred_region
      _
    $region29: #{model_forward.1} parent=1 // pred_fallthru
      _
    // Predicated region
    $region30: #{model_forward.1} parent=1 // pred_check
      _
    $region31: #{model_forward.1} parent=1 // pred_check_branch
      %41 = sbr.rel (0) target = $region33
    $region32: #{model_forward.1} parent=1 // pred_region
      _
    $region33: #{model_forward.1} parent=1 // pred_fallthru
      _
    // Predicated region
    $region34: #{model_forward.1} parent=1 // pred_check
      _
    $region35: #{model_forward.1} parent=1 // pred_check_branch
      %43 = sbr.rel (0) target = $region37
    $region36: #{model_forward.1} parent=1 // pred_region
      _
    $region37: #{model_forward.1} parent=1 // pred_fallthru
      _
    // Predicated region
    $region38: #{model_forward.1} parent=1 // pred_check
      _
    $region39: #{model_forward.1} parent=1 // pred_check_branch
      %45 = sbr.rel (0) target = $region41
    $region40: #{model_forward.1} parent=1 // pred_region
      _
    $region41: #{model_forward.1} parent=1 // pred_fallthru
      _
    // Predicated region
    $region42: #{model_forward.1} parent=1 // pred_check
      _
    $region43: #{model_forward.1} parent=1 // pred_check_branch
      %47 = sbr.rel (0) target = $region45
    $region44: #{model_forward.1} parent=1 // pred_region
      _
    $region45: #{model_forward.1} parent=1 // pred_fallthru
      _
    // Predicated region
    $region46: #{model_forward.1} parent=1 // pred_check
      _
    $region47: #{model_forward.1} parent=1 // pred_check_branch
      %49 = sbr.rel (0) target = $region49
    $region48: #{model_forward.1} parent=1 // pred_region
      _
    $region49: #{model_forward.1} parent=1 // pred_fallthru
      _
    // Predicated region
    $region50: #{model_forward.1} parent=1 // pred_check
      _
    $region51: #{model_forward.1} parent=1 // pred_check_branch
      %51 = sbr.rel (0) target = $region53
    $region52: #{model_forward.1} parent=1 // pred_region
      _
    $region53: #{model_forward.1} parent=1 // pred_fallthru
      _
    // Predicated region
    $region54: #{model_forward.1} parent=1 // pred_check
      _
    $region55: #{model_forward.1} parent=1 // pred_check_branch
      %53 = sbr.rel (0) target = $region57
    $region56: #{model_forward.1} parent=1 // pred_region
      _
    $region57: #{model_forward.1} parent=1 // pred_fallthru
      _
    // Predicated region
    $region58: #{model_forward.1} parent=1 // pred_check
      _
    $region59: #{model_forward.1} parent=1 // pred_check_branch
      %55 = sbr.rel (0) target = $region61
    $region60: #{model_forward.1} parent=1 // pred_region
      %s57 = ssub.s32 16, 16
      %58 = vsyncadd [#allocation7], %s57
      %s60 = sshll.u32 %s14, 4
      %s61 = int_to_ptr.vmem [resolvable:$true] %s60
      %63 = dma.vmem_to_smem %s61, 16, [#allocation5], [#allocation7]
    $region61: #{model_forward.1} parent=1 // pred_fallthru
      _
    // Predicated region
    $region62: #{model_forward.1} parent=1 // pred_check
      _
    $region63: #{model_forward.1} parent=1 // pred_check_branch
      %65 = sbr.rel (0) target = $region65
    $region64: #{model_forward.1} parent=1 // pred_region
      _
    $region65: #{model_forward.1} parent=1 // pred_fallthru
      _
    // Predicated region
    $region66: #{model_forward.1} parent=1 // pred_check
      _
    $region67: #{model_forward.1} parent=1 // pred_check_branch
      %67 = sbr.rel (0) target = $region69
    $region68: #{model_forward.1} parent=1 // pred_region
      _
    $region69: #{model_forward.1} parent=1 // pred_fallthru
      _
    // Predicated region
    $region70: #{model_forward.1} parent=1 // pred_check
      _
    $region71: #{model_forward.1} parent=1 // pred_check_branch
      %69 = sbr.rel (0) target = $region73
    $region72: #{model_forward.1} parent=1 // pred_region
      _
    $region73: #{model_forward.1} parent=1 // pred_fallthru
      _
    // Predicated region
    $region74: #{model_forward.1} parent=1 // pred_check
      _
    $region75: #{model_forward.1} parent=1 // pred_check_branch
      %71 = sbr.rel (0) target = $region77
    $region76: #{model_forward.1} parent=1 // pred_region
      _
    $region77: #{model_forward.1} parent=1 // pred_fallthru
      _
    // Predicated region
    $region78: #{model_forward.1} parent=1 // pred_check
      _
    $region79: #{model_forward.1} parent=1 // pred_check_branch
      %73 = sbr.rel (0) target = $region81
    $region80: #{model_forward.1} parent=1 // pred_region
      %74 = dma.done [#allocation7], 16
    $region81: #{model_forward.1} parent=1 // pred_fallthru
      _
    %75 = sfence
    %v76 = vld [vmem:[%s3] sm:$0xff]
    %v77 = vld [vmem:[%s3 + $0x8] sm:$0xff]
    %v78 = vld [vmem:[%s3 + $0x10] sm:$0xff]
    %v79 = vld [vmem:[%s3 + $0x18] sm:$0xff]
    %vm80 = vcmp.gt.f32.partialorder %v76, 0.5
    %vm81 = vcmp.gt.f32.partialorder %v77, 0.5
    %vm82 = vcmp.gt.f32.partialorder %v78, 0.5
    %vm83 = vcmp.gt.f32.partialorder %v79, 0.5
    %v84 = vld [vmem:[%s0] sm:$0xff]
    %v85 = vld [vmem:[%s0 + $0x8] sm:$0xff]
    %v86 = vld [vmem:[%s0 + $0x10] sm:$0xff]
    %v87 = vld [vmem:[%s0 + $0x18] sm:$0xff]
    %v88 = vld [vmem:[%s4] sm:$0xff]
    %v89 = vld [vmem:[%s4 + $0x8] sm:$0xff]
    %v90 = vld [vmem:[%s4 + $0x10] sm:$0xff]
    %v91 = vld [vmem:[%s4 + $0x18] sm:$0xff]
    %vm92 = vcmask 261120
    %v94 = vsel %vm92, %v84, 0
    %v97 = vsel %vm92, %v85, 0
    %v100 = vsel %vm92, %v86, 0
    %v103 = vsel %vm92, %v87, 0
    %105 = vmatprep.subr.mxu0 0.0
    %106 = vmatpush1.msra.mxu0 %v88
    %107 = vmatprep.subr.mxu0 0.0
    %108 = vmatpush1.msra.mxu0 %v89
    %109 = vmatprep.subr.mxu0 0.0
    %110 = vmatpush1.msra.mxu0 %v90
    %111 = vmatprep.subr.mxu0 0.0
    %112 = vmatpush1.msra.mxu0 %v91
    %113 = vmatprep.subr.mxu0 0.0
    %114 = vmatpush1.msra.mxu0 0.0
    %115 = vmatprep.subr.mxu0 0.0
    %116 = vmatpush1.msra.mxu0 0.0
    %117 = vmatprep.subr.mxu0 0.0
    %118 = vmatpush1.msra.mxu0 0.0
    %119 = vmatprep.subr.mxu0 0.0
    %120 = vmatpush1.msra.mxu0 0.0
    %121 = vmatprep.subr.mxu0 0.0
    %122 = vmatpush1.msra.mxu0 0.0
    %123 = vmatprep.subr.mxu0 0.0
    %124 = vmatpush1.msra.mxu0 0.0
    %125 = vmatprep.subr.mxu0 0.0
    %126 = vmatpush1.msra.mxu0 0.0
    %127 = vmatprep.subr.mxu0 0.0
    %128 = vmatpush1.msra.mxu0 0.0
    %129 = vmatprep.subr.mxu0 0.0
    %130 = vmatpush1.msra.mxu0 0.0
    %131 = vmatprep.subr.mxu0 0.0
    %132 = vmatpush1.msra.mxu0 0.0
    %133 = vmatprep.subr.mxu0 0.0
    %134 = vmatpush1.msra.mxu0 0.0
    %135 = vmatprep.subr.mxu0 0.0
    %136 = vmatpush1.msra.mxu0 0.0
    %137 = vmatprep.subr.mxu0 0.0
    %138 = vmatpush1.msra.mxu0 0.0
    %139 = vmatprep.subr.mxu0 0.0
    %140 = vmatpush1.msra.mxu0 0.0
    %141 = vmatprep.subr.mxu0 0.0
    %142 = vmatpush1.msra.mxu0 0.0
    %143 = vmatprep.subr.mxu0 0.0
    %144 = vmatpush1.msra.mxu0 0.0
    %145 = vmatprep.subr.mxu0 0.0
    %146 = vmatpush1.msra.mxu0 0.0
    %147 = vmatprep.subr.mxu0 0.0
    %148 = vmatpush1.msra.mxu0 0.0
    %149 = vmatprep.subr.mxu0 0.0
    %150 = vmatpush1.msra.mxu0 0.0
    %151 = vmatprep.subr.mxu0 0.0
    %152 = vmatpush1.msra.mxu0 0.0
    %153 = vmatprep.subr.mxu0 0.0
    %154 = vmatpush1.msra.mxu0 0.0
    %155 = vmatprep.subr.mxu0 0.0
    %156 = vmatpush1.msra.mxu0 0.0
    %157 = vmatprep.subr.mxu0 0.0
    %158 = vmatpush1.msra.mxu0 0.0
    %159 = vmatprep.subr.mxu0 0.0
    %160 = vmatpush1.msra.mxu0 0.0
    %161 = vmatprep.subr.mxu0 0.0
    %162 = vmatpush1.msra.mxu0 0.0
    %163 = vmatprep.subr.mxu0 0.0
    %164 = vmatpush1.msra.mxu0 0.0
    %165 = vmatprep.subr.mxu0 0.0
    %166 = vmatpush1.msra.mxu0 0.0
    %167 = vmatprep.subr.mxu0 0.0
    %168 = vmatpush1.msra.mxu0 0.0
    %169 = vmatprep.mubr.f32.mxu0 0.0
    %170 = vmatmul.mubr.f32.gmra.mrb[0].mxu0 %v94
    %v171 = vpop.f32.mrb[0].mxu0
    %v172 = vadd.f32 0.0, %v171
    %v173 = vpop.f32.mrb[0].mxu0
    %174 = vmatprep.mubr.f32.mxu0 0.0
    %175 = vmatmul.mubr.f32.gmra.mrb[0].mxu0 %v97
    %v176 = vpop.f32.mrb[0].mxu0
    %v177 = vadd.f32 0.0, %v176
    %v178 = vpop.f32.mrb[0].mxu0
    %179 = vmatprep.mubr.f32.mxu0 0.0
    %180 = vmatmul.mubr.f32.gmra.mrb[0].mxu0 %v100
    %v181 = vpop.f32.mrb[0].mxu0
    %v182 = vadd.f32 0.0, %v181
    %v183 = vpop.f32.mrb[0].mxu0
    %184 = vmatprep.mubr.f32.mxu0 0.0
    %185 = vmatmul.mubr.f32.gmra.mrb[0].mxu0 %v103
    %v186 = vpop.f32.mrb[0].mxu0
    %v187 = vadd.f32 0.0, %v186
    %v188 = vpop.f32.mrb[0].mxu0
    %189 = vdwg.mxu0
    %190 = vst.msk [vmem:[#allocation4] sm:$0xff] %vm92, %v172
    %191 = vst.msk [vmem:[#allocation4 + $0x8] sm:$0xff] %vm92, %v177
    %192 = vst.msk [vmem:[#allocation4 + $0x10] sm:$0xff] %vm92, %v182
    %193 = vst.msk [vmem:[#allocation4 + $0x18] sm:$0xff] %vm92, %v187
    %vm194 = vcmask 130048
    %195 = vst.msk [vmem:[#allocation2] sm:$0xff] %vm194, 0.0
    %196 = vst.msk [vmem:[#allocation2 + $0x8] sm:$0xff] %vm194, 0.0
    %197 = vst.msk [vmem:[#allocation2 + $0x10] sm:$0xff] %vm194, 0.0
    %198 = vst.msk [vmem:[#allocation2 + $0x18] sm:$0xff] %vm194, 0.0
    %vm199 = vcmask 125952
    %200 = vst.msk [vmem:[#allocation2 + $0x20] sm:$0xf] %vm199, 0.0
    %v201 = vld [vmem:[%s1] sm:$0xff]
    %v202 = vld [vmem:[%s1 + $0x8] sm:$0xf]
    %203 = vst.msk [vmem:[#allocation2 + $0x3] sm:$0xff] %vm194, %v201
    %204 = vst.msk [vmem:[#allocation2 + $0xb] sm:$0xf] %vm199, %v202
    %v205 = vld [vmem:[#allocation2 + $0x1] sm:$0xff]
    %v206 = vld [vmem:[#allocation2 + $0x9] sm:$0xff]
    %v207 = vand.u32 2147483647, %v205
    %v208 = vand.u32 2147483647, %v206
    %v209 = vsel %vm194, %v207, 0.0
    %210 = vadd.xlane.f32.xlu0 %v209
    %v211 = vpop.xlane.xlu0 %210
    %v212 = vsel %vm194, %v208, 0.0
    %213 = vadd.xlane.f32.xlu0 %v212
    %v214 = vpop.xlane.xlu0 %213
    %vm215 = vcmp.eq.f32.partialorder %v211, 0.0
    %vm216 = vcmp.eq.f32.partialorder %v214, 0.0
    %vm217 = vmand %vm215, %vm80
    %vm218 = vmand %vm216, %vm81
    %v219 = vsel %vm217, 1, 0
    %v220 = vsel %vm218, 1, 0
    %221 = vset.pattern.permute.xlu0 0
    %222 = vperm.xlu0 %221, %v219
    %v223 = vpop.permute.xlu0 %222
    %224 = vset.pattern.permute.xlu0 0
    %225 = vperm.xlu0 %224, %v220
    %v226 = vpop.permute.xlu0 %225
    %vm227 = vcmp.eq.s32.totalorder %v223, 1
    %vm228 = vcmp.eq.s32.totalorder %v226, 1
    %v229 = vsel %vm227, 1e-06, %v205
    %v230 = vsel %vm228, 1e-06, %v206
    %231 = vst.msk [vmem:[#allocation2 + $0x1] sm:$0xff] %vm194, %v229
    %232 = vst.msk [vmem:[#allocation2 + $0x9] sm:$0xff] %vm194, %v230
    %v233 = vld [vmem:[#allocation2] sm:$0xff]
    %v234 = vld [vmem:[#allocation2 + $0x8] sm:$0xff]
    %v235 = vld [vmem:[%s5] sm:$0xff]
    %v236 = vld [vmem:[%s5 + $0x8] sm:$0xff]
    %v237 = vld [vmem:[#allocation2 + $0x1] sm:$0xff]
    %v238 = vld [vmem:[#allocation2 + $0x9] sm:$0xff]
    %s239 = scalar_lea.vmem %s5, 16
    %v240 = vld [vmem:[%s239] sm:$0xff]
    %v241 = vld [vmem:[%s239 + $0x8] sm:$0xff]
    %v243 = vsel %vm194, %v237, 0
    %v246 = vsel %vm194, %v238, 0
    %248 = vmatprep.subr.mxu0 0.0
    %249 = vmatpush1.msra.mxu0 %v240
    %250 = vmatprep.subr.mxu0 0.0
    %251 = vmatpush1.msra.mxu0 %v241
    %252 = vmatprep.subr.mxu0 0.0
    %253 = vmatpush1.msra.mxu0 0.0
    %254 = vmatprep.subr.mxu0 0.0
    %255 = vmatpush1.msra.mxu0 0.0
    %256 = vmatprep.subr.mxu0 0.0
    %257 = vmatpush1.msra.mxu0 0.0
    %258 = vmatprep.subr.mxu0 0.0
    %259 = vmatpush1.msra.mxu0 0.0
    %260 = vmatprep.subr.mxu0 0.0
    %261 = vmatpush1.msra.mxu0 0.0
    %262 = vmatprep.subr.mxu0 0.0
    %263 = vmatpush1.msra.mxu0 0.0
    %264 = vmatprep.subr.mxu0 0.0
    %265 = vmatpush1.msra.mxu0 0.0
    %266 = vmatprep.subr.mxu0 0.0
    %267 = vmatpush1.msra.mxu0 0.0
    %268 = vmatprep.subr.mxu0 0.0
    %269 = vmatpush1.msra.mxu0 0.0
    %270 = vmatprep.subr.mxu0 0.0
    %271 = vmatpush1.msra.mxu0 0.0
    %272 = vmatprep.subr.mxu0 0.0
    %273 = vmatpush1.msra.mxu0 0.0
    %274 = vmatprep.subr.mxu0 0.0
    %275 = vmatpush1.msra.mxu0 0.0
    %276 = vmatprep.subr.mxu0 0.0
    %277 = vmatpush1.msra.mxu0 0.0
    %278 = vmatprep.subr.mxu0 0.0
    %279 = vmatpush1.msra.mxu0 0.0
    %280 = vmatprep.subr.mxu0 0.0
    %281 = vmatpush1.msra.mxu0 0.0
    %282 = vmatprep.subr.mxu0 0.0
    %283 = vmatpush1.msra.mxu0 0.0
    %284 = vmatprep.subr.mxu0 0.0
    %285 = vmatpush1.msra.mxu0 0.0
    %286 = vmatprep.subr.mxu0 0.0
    %287 = vmatpush1.msra.mxu0 0.0
    %288 = vmatprep.subr.mxu0 0.0
    %289 = vmatpush1.msra.mxu0 0.0
    %290 = vmatprep.subr.mxu0 0.0
    %291 = vmatpush1.msra.mxu0 0.0
    %292 = vmatprep.subr.mxu0 0.0
    %293 = vmatpush1.msra.mxu0 0.0
    %294 = vmatprep.subr.mxu0 0.0
    %295 = vmatpush1.msra.mxu0 0.0
    %296 = vmatprep.subr.mxu0 0.0
    %297 = vmatpush1.msra.mxu0 0.0
    %298 = vmatprep.subr.mxu0 0.0
    %299 = vmatpush1.msra.mxu0 0.0
    %300 = vmatprep.subr.mxu0 0.0
    %301 = vmatpush1.msra.mxu0 0.0
    %302 = vmatprep.subr.mxu0 0.0
    %303 = vmatpush1.msra.mxu0 0.0
    %304 = vmatprep.subr.mxu0 0.0
    %305 = vmatpush1.msra.mxu0 0.0
    %306 = vmatprep.subr.mxu0 0.0
    %307 = vmatpush1.msra.mxu0 0.0
    %308 = vmatprep.subr.mxu0 0.0
    %309 = vmatpush1.msra.mxu0 0.0
    %310 = vmatprep.subr.mxu0 0.0
    %311 = vmatpush1.msra.mxu0 0.0
    %312 = vmatprep.mubr.f32.mxu0 0.0
    %313 = vmatmul.mubr.f32.gmra.mrb[0].mxu0 %v243
    %v314 = vpop.f32.mrb[0].mxu0
    %v315 = vadd.f32 0.0, %v314
    %v316 = vpop.f32.mrb[0].mxu0
    %317 = vmatprep.mubr.f32.mxu0 0.0
    %318 = vmatmul.mubr.f32.gmra.mrb[0].mxu0 %v246
    %v319 = vpop.f32.mrb[0].mxu0
    %v320 = vadd.f32 0.0, %v319
    %v321 = vpop.f32.mrb[0].mxu0
    %322 = vdwg.mxu0
    %v324 = vsel %vm194, %v233, 0
    %v327 = vsel %vm194, %v234, 0
    %329 = vmatprep.subr.mxu0 0.0
    %330 = vmatpush1.msra.mxu0 %v235
    %331 = vmatprep.subr.mxu0 0.0
    %332 = vmatpush1.msra.mxu0 %v236
    %333 = vmatprep.subr.mxu0 0.0
    %334 = vmatpush1.msra.mxu0 0.0
    %335 = vmatprep.subr.mxu0 0.0
    %336 = vmatpush1.msra.mxu0 0.0
    %337 = vmatprep.subr.mxu0 0.0
    %338 = vmatpush1.msra.mxu0 0.0
    %339 = vmatprep.subr.mxu0 0.0
    %340 = vmatpush1.msra.mxu0 0.0
    %341 = vmatprep.subr.mxu0 0.0
    %342 = vmatpush1.msra.mxu0 0.0
    %343 = vmatprep.subr.mxu0 0.0
    %344 = vmatpush1.msra.mxu0 0.0
    %345 = vmatprep.subr.mxu0 0.0
    %346 = vmatpush1.msra.mxu0 0.0
    %347 = vmatprep.subr.mxu0 0.0
    %348 = vmatpush1.msra.mxu0 0.0
    %349 = vmatprep.subr.mxu0 0.0
    %350 = vmatpush1.msra.mxu0 0.0
    %351 = vmatprep.subr.mxu0 0.0
    %352 = vmatpush1.msra.mxu0 0.0
    %353 = vmatprep.subr.mxu0 0.0
    %354 = vmatpush1.msra.mxu0 0.0
    %355 = vmatprep.subr.mxu0 0.0
    %356 = vmatpush1.msra.mxu0 0.0
    %357 = vmatprep.subr.mxu0 0.0
    %358 = vmatpush1.msra.mxu0 0.0
    %359 = vmatprep.subr.mxu0 0.0
    %360 = vmatpush1.msra.mxu0 0.0
    %361 = vmatprep.subr.mxu0 0.0
    %362 = vmatpush1.msra.mxu0 0.0
    %363 = vmatprep.subr.mxu0 0.0
    %364 = vmatpush1.msra.mxu0 0.0
    %365 = vmatprep.subr.mxu0 0.0
    %366 = vmatpush1.msra.mxu0 0.0
    %367 = vmatprep.subr.mxu0 0.0
    %368 = vmatpush1.msra.mxu0 0.0
    %369 = vmatprep.subr.mxu0 0.0
    %370 = vmatpush1.msra.mxu0 0.0
    %371 = vmatprep.subr.mxu0 0.0
    %372 = vmatpush1.msra.mxu0 0.0
    %373 = vmatprep.subr.mxu0 0.0
    %374 = vmatpush1.msra.mxu0 0.0
    %375 = vmatprep.subr.mxu0 0.0
    %376 = vmatpush1.msra.mxu0 0.0
    %377 = vmatprep.subr.mxu0 0.0
    %378 = vmatpush1.msra.mxu0 0.0
    %379 = vmatprep.subr.mxu0 0.0
    %380 = vmatpush1.msra.mxu0 0.0
    %381 = vmatprep.subr.mxu0 0.0
    %382 = vmatpush1.msra.mxu0 0.0
    %383 = vmatprep.subr.mxu0 0.0
    %384 = vmatpush1.msra.mxu0 0.0
    %385 = vmatprep.subr.mxu0 0.0
    %386 = vmatpush1.msra.mxu0 0.0
    %387 = vmatprep.subr.mxu0 0.0
    %388 = vmatpush1.msra.mxu0 0.0
    %389 = vmatprep.subr.mxu0 0.0
    %390 = vmatpush1.msra.mxu0 0.0
    %391 = vmatprep.subr.mxu0 0.0
    %392 = vmatpush1.msra.mxu0 0.0
    %393 = vmatprep.mubr.f32.mxu0 0.0
    %394 = vmatmul.mubr.f32.gmra.mrb[0].mxu0 %v324
    %v395 = vpop.f32.mrb[0].mxu0
    %v396 = vadd.f32 %v315, %v395
    %v397 = vpop.f32.mrb[0].mxu0
    %398 = vmatprep.mubr.f32.mxu0 0.0
    %399 = vmatmul.mubr.f32.gmra.mrb[0].mxu0 %v327
    %v400 = vpop.f32.mrb[0].mxu0
    %v401 = vadd.f32 %v320, %v400
    %v402 = vpop.f32.mrb[0].mxu0
    %403 = vdwg.mxu0
    %v404 = vld [vmem:[#allocation2 + $0x2] sm:$0xff]
    %v405 = vld [vmem:[#allocation2 + $0xa] sm:$0xff]
    %s406 = scalar_lea.vmem %s5, 32
    %v407 = vld [vmem:[%s406] sm:$0xff]
    %v408 = vld [vmem:[%s406 + $0x8] sm:$0xff]
    %v410 = vsel %vm194, %v404, 0
    %v413 = vsel %vm194, %v405, 0
    %415 = vmatprep.subr.mxu0 0.0
    %416 = vmatpush1.msra.mxu0 %v407
    %417 = vmatprep.subr.mxu0 0.0
    %418 = vmatpush1.msra.mxu0 %v408
    %419 = vmatprep.subr.mxu0 0.0
    %420 = vmatpush1.msra.mxu0 0.0
    %421 = vmatprep.subr.mxu0 0.0
    %422 = vmatpush1.msra.mxu0 0.0
    %423 = vmatprep.subr.mxu0 0.0
    %424 = vmatpush1.msra.mxu0 0.0
    %425 = vmatprep.subr.mxu0 0.0
    %426 = vmatpush1.msra.mxu0 0.0
    %427 = vmatprep.subr.mxu0 0.0
    %428 = vmatpush1.msra.mxu0 0.0
    %429 = vmatprep.subr.mxu0 0.0
    %430 = vmatpush1.msra.mxu0 0.0
    %431 = vmatprep.subr.mxu0 0.0
    %432 = vmatpush1.msra.mxu0 0.0
    %433 = vmatprep.subr.mxu0 0.0
    %434 = vmatpush1.msra.mxu0 0.0
    %435 = vmatprep.subr.mxu0 0.0
    %436 = vmatpush1.msra.mxu0 0.0
    %437 = vmatprep.subr.mxu0 0.0
    %438 = vmatpush1.msra.mxu0 0.0
    %439 = vmatprep.subr.mxu0 0.0
    %440 = vmatpush1.msra.mxu0 0.0
    %441 = vmatprep.subr.mxu0 0.0
    %442 = vmatpush1.msra.mxu0 0.0
    %443 = vmatprep.subr.mxu0 0.0
    %444 = vmatpush1.msra.mxu0 0.0
    %445 = vmatprep.subr.mxu0 0.0
    %446 = vmatpush1.msra.mxu0 0.0
    %447 = vmatprep.subr.mxu0 0.0
    %448 = vmatpush1.msra.mxu0 0.0
    %449 = vmatprep.subr.mxu0 0.0
    %450 = vmatpush1.msra.mxu0 0.0
    %451 = vmatprep.subr.mxu0 0.0
    %452 = vmatpush1.msra.mxu0 0.0
    %453 = vmatprep.subr.mxu0 0.0
    %454 = vmatpush1.msra.mxu0 0.0
    %455 = vmatprep.subr.mxu0 0.0
    %456 = vmatpush1.msra.mxu0 0.0
    %457 = vmatprep.subr.mxu0 0.0
    %458 = vmatpush1.msra.mxu0 0.0
    %459 = vmatprep.subr.mxu0 0.0
    %460 = vmatpush1.msra.mxu0 0.0
    %461 = vmatprep.subr.mxu0 0.0
    %462 = vmatpush1.msra.mxu0 0.0
    %463 = vmatprep.subr.mxu0 0.0
    %464 = vmatpush1.msra.mxu0 0.0
    %465 = vmatprep.subr.mxu0 0.0
    %466 = vmatpush1.msra.mxu0 0.0
    %467 = vmatprep.subr.mxu0 0.0
    %468 = vmatpush1.msra.mxu0 0.0
    %469 = vmatprep.subr.mxu0 0.0
    %470 = vmatpush1.msra.mxu0 0.0
    %471 = vmatprep.subr.mxu0 0.0
    %472 = vmatpush1.msra.mxu0 0.0
    %473 = vmatprep.subr.mxu0 0.0
    %474 = vmatpush1.msra.mxu0 0.0
    %475 = vmatprep.subr.mxu0 0.0
    %476 = vmatpush1.msra.mxu0 0.0
    %477 = vmatprep.subr.mxu0 0.0
    %478 = vmatpush1.msra.mxu0 0.0
    %479 = vmatprep.mubr.f32.mxu0 0.0
    %480 = vmatmul.mubr.f32.gmra.mrb[0].mxu0 %v410
    %v481 = vpop.f32.mrb[0].mxu0
    %v482 = vadd.f32 0.0, %v481
    %v483 = vpop.f32.mrb[0].mxu0
    %484 = vmatprep.mubr.f32.mxu0 0.0
    %485 = vmatmul.mubr.f32.gmra.mrb[0].mxu0 %v413
    %v486 = vpop.f32.mrb[0].mxu0
    %v487 = vadd.f32 0.0, %v486
    %v488 = vpop.f32.mrb[0].mxu0
    %489 = vdwg.mxu0
    %v490 = vadd.f32 %v396, %v482
    %v491 = vadd.f32 %v401, %v487
    %v492 = vld [vmem:[%s6] sm:$0x1]
    %v494 = vlaneseq
    %v495 = vshrl.u32 %v494, 7
    %v496 = vsub.s32 0, %v495
    %v497 = vrot.slane %v492, %v496
    %v499 = vadd.f32 %v490, %v497
    %v500 = vadd.f32 %v491, %v497
    %v501 = vsel %vm92, %v499, 0.0
    %502 = vadd.xlane.f32.xlu0 %v501
    %v503 = vpop.xlane.xlu0 %502
    %v504 = vsel %vm92, %v500, 0.0
    %505 = vadd.xlane.f32.xlu0 %v504
    %v506 = vpop.xlane.xlu0 %505
    %v507 = vrcp.pop 32.0
    %v508 = vmul.f32 %v503, %v507
    %v509 = vmul.f32 %v506, %v507
    %v510 = vsub.f32 %v499, %v508
    %v511 = vsub.f32 %v500, %v509
    %v512 = vmul.f32 %v510, %v510
    %v513 = vmul.f32 %v511, %v511
    %v514 = vsel %vm92, %v512, 0.0
    %515 = vadd.xlane.f32.xlu0 %v514
    %v516 = vpop.xlane.xlu0 %515
    %v517 = vsel %vm92, %v513, 0.0
    %518 = vadd.xlane.f32.xlu0 %v517
    %v519 = vpop.xlane.xlu0 %518
    %v520 = vmul.f32 %v516, %v507
    %v521 = vmul.f32 %v519, %v507
    %v522 = vadd.f32 %v520, 1e-06
    %v523 = vadd.f32 %v521, 1e-06
    %v524 = vrsqrt.pop %v522
    %v525 = vrsqrt.pop %v523
    %v526 = vmul.f32 %v510, %v524
    %v527 = vmul.f32 %v511, %v525
    %v528 = vld [vmem:[%s9] sm:$0x1]
    %v530 = vlaneseq
    %v531 = vshrl.u32 %v530, 7
    %v532 = vsub.s32 0, %v531
    %v533 = vrot.slane %v528, %v532
    %v535 = vmul.f32 %v526, %v533
    %v536 = vmul.f32 %v527, %v533
    %v537 = vld [vmem:[%s10] sm:$0x1]
    %v539 = vlaneseq
    %v540 = vshrl.u32 %v539, 7
    %v541 = vsub.s32 0, %v540
    %v542 = vrot.slane %v537, %v541
    %v544 = vadd.f32 %v535, %v542
    %v545 = vadd.f32 %v536, %v542
    %v546 = vmax.f32 %v544, 0.0
    %v547 = vmax.f32 %v545, 0.0
    %548 = vst.msk [vmem:[#allocation4 + $0x20] sm:$0xff] %vm92, %v546
    %549 = vst.msk [vmem:[#allocation4 + $0x28] sm:$0xff] %vm92, %v547
    %v550 = vld [vmem:[%s1 + $0xc] sm:$0xff]
    %v551 = vld [vmem:[%s1 + $0x14] sm:$0xf]
    %552 = vst.msk [vmem:[#allocation2 + $0x15] sm:$0xff] %vm194, %v550
    %553 = vst.msk [vmem:[#allocation2 + $0x1d] sm:$0xf] %vm199, %v551
    %v554 = vld [vmem:[#allocation2 + $0x13] sm:$0xff]
    %v555 = vld [vmem:[#allocation2 + $0x1b] sm:$0xff]
    %v556 = vand.u32 2147483647, %v554
    %v557 = vand.u32 2147483647, %v555
    %v558 = vsel %vm194, %v556, 0.0
    %559 = vadd.xlane.f32.xlu0 %v558
    %v560 = vpop.xlane.xlu0 %559
    %v561 = vsel %vm194, %v557, 0.0
    %562 = vadd.xlane.f32.xlu0 %v561
    %v563 = vpop.xlane.xlu0 %562
    %vm564 = vcmp.eq.f32.partialorder %v560, 0.0
    %vm565 = vcmp.eq.f32.partialorder %v563, 0.0
    %vm566 = vmand %vm564, %vm82
    %vm567 = vmand %vm565, %vm83
    %v568 = vsel %vm566, 1, 0
    %v569 = vsel %vm567, 1, 0
    %570 = vset.pattern.permute.xlu0 0
    %571 = vperm.xlu0 %570, %v568
    %v572 = vpop.permute.xlu0 %571
    %573 = vset.pattern.permute.xlu0 0
    %574 = vperm.xlu0 %573, %v569
    %v575 = vpop.permute.xlu0 %574
    %vm576 = vcmp.eq.s32.totalorder %v572, 1
    %vm577 = vcmp.eq.s32.totalorder %v575, 1
    %v578 = vsel %vm576, 1e-06, %v554
    %v579 = vsel %vm577, 1e-06, %v555
    %580 = vst.msk [vmem:[#allocation2 + $0x13] sm:$0xff] %vm194, %v578
    %581 = vst.msk [vmem:[#allocation2 + $0x1b] sm:$0xff] %vm194, %v579
    %v582 = vld [vmem:[#allocation2 + $0x12] sm:$0xff]
    %v583 = vld [vmem:[#allocation2 + $0x1a] sm:$0xff]
    %v584 = vld [vmem:[%s5] sm:$0xff]
    %v585 = vld [vmem:[%s5 + $0x8] sm:$0xff]
    %v586 = vld [vmem:[#allocation2 + $0x13] sm:$0xff]
    %v587 = vld [vmem:[#allocation2 + $0x1b] sm:$0xff]
    %v588 = vld [vmem:[%s239] sm:$0xff]
    %v589 = vld [vmem:[%s239 + $0x8] sm:$0xff]
    %v591 = vsel %vm194, %v586, 0
    %v594 = vsel %vm194, %v587, 0
    %596 = vmatprep.subr.mxu0 0.0
    %597 = vmatpush1.msra.mxu0 %v588
    %598 = vmatprep.subr.mxu0 0.0
    %599 = vmatpush1.msra.mxu0 %v589
    %600 = vmatprep.subr.mxu0 0.0
    %601 = vmatpush1.msra.mxu0 0.0
    %602 = vmatprep.subr.mxu0 0.0
    %603 = vmatpush1.msra.mxu0 0.0
    %604 = vmatprep.subr.mxu0 0.0
    %605 = vmatpush1.msra.mxu0 0.0
    %606 = vmatprep.subr.mxu0 0.0
    %607 = vmatpush1.msra.mxu0 0.0
    %608 = vmatprep.subr.mxu0 0.0
    %609 = vmatpush1.msra.mxu0 0.0
    %610 = vmatprep.subr.mxu0 0.0
    %611 = vmatpush1.msra.mxu0 0.0
    %612 = vmatprep.subr.mxu0 0.0
    %613 = vmatpush1.msra.mxu0 0.0
    %614 = vmatprep.subr.mxu0 0.0
    %615 = vmatpush1.msra.mxu0 0.0
    %616 = vmatprep.subr.mxu0 0.0
    %617 = vmatpush1.msra.mxu0 0.0
    %618 = vmatprep.subr.mxu0 0.0
    %619 = vmatpush1.msra.mxu0 0.0
    %620 = vmatprep.subr.mxu0 0.0
    %621 = vmatpush1.msra.mxu0 0.0
    %622 = vmatprep.subr.mxu0 0.0
    %623 = vmatpush1.msra.mxu0 0.0
    %624 = vmatprep.subr.mxu0 0.0
    %625 = vmatpush1.msra.mxu0 0.0
    %626 = vmatprep.subr.mxu0 0.0
    %627 = vmatpush1.msra.mxu0 0.0
    %628 = vmatprep.subr.mxu0 0.0
    %629 = vmatpush1.msra.mxu0 0.0
    %630 = vmatprep.subr.mxu0 0.0
    %631 = vmatpush1.msra.mxu0 0.0
    %632 = vmatprep.subr.mxu0 0.0
    %633 = vmatpush1.msra.mxu0 0.0
    %634 = vmatprep.subr.mxu0 0.0
    %635 = vmatpush1.msra.mxu0 0.0
    %636 = vmatprep.subr.mxu0 0.0
    %637 = vmatpush1.msra.mxu0 0.0
    %638 = vmatprep.subr.mxu0 0.0
    %639 = vmatpush1.msra.mxu0 0.0
    %640 = vmatprep.subr.mxu0 0.0
    %641 = vmatpush1.msra.mxu0 0.0
    %642 = vmatprep.subr.mxu0 0.0
    %643 = vmatpush1.msra.mxu0 0.0
    %644 = vmatprep.subr.mxu0 0.0
    %645 = vmatpush1.msra.mxu0 0.0
    %646 = vmatprep.subr.mxu0 0.0
    %647 = vmatpush1.msra.mxu0 0.0
    %648 = vmatprep.subr.mxu0 0.0
    %649 = vmatpush1.msra.mxu0 0.0
    %650 = vmatprep.subr.mxu0 0.0
    %651 = vmatpush1.msra.mxu0 0.0
    %652 = vmatprep.subr.mxu0 0.0
    %653 = vmatpush1.msra.mxu0 0.0
    %654 = vmatprep.subr.mxu0 0.0
    %655 = vmatpush1.msra.mxu0 0.0
    %656 = vmatprep.subr.mxu0 0.0
    %657 = vmatpush1.msra.mxu0 0.0
    %658 = vmatprep.subr.mxu0 0.0
    %659 = vmatpush1.msra.mxu0 0.0
    %660 = vmatprep.mubr.f32.mxu0 0.0
    %661 = vmatmul.mubr.f32.gmra.mrb[0].mxu0 %v591
    %v662 = vpop.f32.mrb[0].mxu0
    %v663 = vadd.f32 0.0, %v662
    %v664 = vpop.f32.mrb[0].mxu0
    %665 = vmatprep.mubr.f32.mxu0 0.0
    %666 = vmatmul.mubr.f32.gmra.mrb[0].mxu0 %v594
    %v667 = vpop.f32.mrb[0].mxu0
    %v668 = vadd.f32 0.0, %v667
    %v669 = vpop.f32.mrb[0].mxu0
    %670 = vdwg.mxu0
    %v672 = vsel %vm194, %v582, 0
    %v675 = vsel %vm194, %v583, 0
    %677 = vmatprep.subr.mxu0 0.0
    %678 = vmatpush1.msra.mxu0 %v584
    %679 = vmatprep.subr.mxu0 0.0
    %680 = vmatpush1.msra.mxu0 %v585
    %681 = vmatprep.subr.mxu0 0.0
    %682 = vmatpush1.msra.mxu0 0.0
    %683 = vmatprep.subr.mxu0 0.0
    %684 = vmatpush1.msra.mxu0 0.0
    %685 = vmatprep.subr.mxu0 0.0
    %686 = vmatpush1.msra.mxu0 0.0
    %687 = vmatprep.subr.mxu0 0.0
    %688 = vmatpush1.msra.mxu0 0.0
    %689 = vmatprep.subr.mxu0 0.0
    %690 = vmatpush1.msra.mxu0 0.0
    %691 = vmatprep.subr.mxu0 0.0
    %692 = vmatpush1.msra.mxu0 0.0
    %693 = vmatprep.subr.mxu0 0.0
    %694 = vmatpush1.msra.mxu0 0.0
    %695 = vmatprep.subr.mxu0 0.0
    %696 = vmatpush1.msra.mxu0 0.0
    %697 = vmatprep.subr.mxu0 0.0
    %698 = vmatpush1.msra.mxu0 0.0
    %699 = vmatprep.subr.mxu0 0.0
    %700 = vmatpush1.msra.mxu0 0.0
    %701 = vmatprep.subr.mxu0 0.0
    %702 = vmatpush1.msra.mxu0 0.0
    %703 = vmatprep.subr.mxu0 0.0
    %704 = vmatpush1.msra.mxu0 0.0
    %705 = vmatprep.subr.mxu0 0.0
    %706 = vmatpush1.msra.mxu0 0.0
    %707 = vmatprep.subr.mxu0 0.0
    %708 = vmatpush1.msra.mxu0 0.0
    %709 = vmatprep.subr.mxu0 0.0
    %710 = vmatpush1.msra.mxu0 0.0
    %711 = vmatprep.subr.mxu0 0.0
    %712 = vmatpush1.msra.mxu0 0.0
    %713 = vmatprep.subr.mxu0 0.0
    %714 = vmatpush1.msra.mxu0 0.0
    %715 = vmatprep.subr.mxu0 0.0
    %716 = vmatpush1.msra.mxu0 0.0
    %717 = vmatprep.subr.mxu0 0.0
    %718 = vmatpush1.msra.mxu0 0.0
    %719 = vmatprep.subr.mxu0 0.0
    %720 = vmatpush1.msra.mxu0 0.0
    %721 = vmatprep.subr.mxu0 0.0
    %722 = vmatpush1.msra.mxu0 0.0
    %723 = vmatprep.subr.mxu0 0.0
    %724 = vmatpush1.msra.mxu0 0.0
    %725 = vmatprep.subr.mxu0 0.0
    %726 = vmatpush1.msra.mxu0 0.0
    %727 = vmatprep.subr.mxu0 0.0
    %728 = vmatpush1.msra.mxu0 0.0
    %729 = vmatprep.subr.mxu0 0.0
    %730 = vmatpush1.msra.mxu0 0.0
    %731 = vmatprep.subr.mxu0 0.0
    %732 = vmatpush1.msra.mxu0 0.0
    %733 = vmatprep.subr.mxu0 0.0
    %734 = vmatpush1.msra.mxu0 0.0
    %735 = vmatprep.subr.mxu0 0.0
    %736 = vmatpush1.msra.mxu0 0.0
    %737 = vmatprep.subr.mxu0 0.0
    %738 = vmatpush1.msra.mxu0 0.0
    %739 = vmatprep.subr.mxu0 0.0
    %740 = vmatpush1.msra.mxu0 0.0
    %741 = vmatprep.mubr.f32.mxu0 0.0
    %742 = vmatmul.mubr.f32.gmra.mrb[0].mxu0 %v672
    %v743 = vpop.f32.mrb[0].mxu0
    %v744 = vadd.f32 %v663, %v743
    %v745 = vpop.f32.mrb[0].mxu0
    %746 = vmatprep.mubr.f32.mxu0 0.0
    %747 = vmatmul.mubr.f32.gmra.mrb[0].mxu0 %v675
    %v748 = vpop.f32.mrb[0].mxu0
    %v749 = vadd.f32 %v668, %v748
    %v750 = vpop.f32.mrb[0].mxu0
    %751 = vdwg.mxu0
    %v752 = vld [vmem:[#allocation2 + $0x14] sm:$0xff]
    %v753 = vld [vmem:[#allocation2 + $0x1c] sm:$0xff]
    %v754 = vld [vmem:[%s406] sm:$0xff]
    %v755 = vld [vmem:[%s406 + $0x8] sm:$0xff]
    %v757 = vsel %vm194, %v752, 0
    %v760 = vsel %vm194, %v753, 0
    %762 = vmatprep.subr.mxu0 0.0
    %763 = vmatpush1.msra.mxu0 %v754
    %764 = vmatprep.subr.mxu0 0.0
    %765 = vmatpush1.msra.mxu0 %v755
    %766 = vmatprep.subr.mxu0 0.0
    %767 = vmatpush1.msra.mxu0 0.0
    %768 = vmatprep.subr.mxu0 0.0
    %769 = vmatpush1.msra.mxu0 0.0
    %770 = vmatprep.subr.mxu0 0.0
    %771 = vmatpush1.msra.mxu0 0.0
    %772 = vmatprep.subr.mxu0 0.0
    %773 = vmatpush1.msra.mxu0 0.0
    %774 = vmatprep.subr.mxu0 0.0
    %775 = vmatpush1.msra.mxu0 0.0
    %776 = vmatprep.subr.mxu0 0.0
    %777 = vmatpush1.msra.mxu0 0.0
    %778 = vmatprep.subr.mxu0 0.0
    %779 = vmatpush1.msra.mxu0 0.0
    %780 = vmatprep.subr.mxu0 0.0
    %781 = vmatpush1.msra.mxu0 0.0
    %782 = vmatprep.subr.mxu0 0.0
    %783 = vmatpush1.msra.mxu0 0.0
    %784 = vmatprep.subr.mxu0 0.0
    %785 = vmatpush1.msra.mxu0 0.0
    %786 = vmatprep.subr.mxu0 0.0
    %787 = vmatpush1.msra.mxu0 0.0
    %788 = vmatprep.subr.mxu0 0.0
    %789 = vmatpush1.msra.mxu0 0.0
    %790 = vmatprep.subr.mxu0 0.0
    %791 = vmatpush1.msra.mxu0 0.0
    %792 = vmatprep.subr.mxu0 0.0
    %793 = vmatpush1.msra.mxu0 0.0
    %794 = vmatprep.subr.mxu0 0.0
    %795 = vmatpush1.msra.mxu0 0.0
    %796 = vmatprep.subr.mxu0 0.0
    %797 = vmatpush1.msra.mxu0 0.0
    %798 = vmatprep.subr.mxu0 0.0
    %799 = vmatpush1.msra.mxu0 0.0
    %800 = vmatprep.subr.mxu0 0.0
    %801 = vmatpush1.msra.mxu0 0.0
    %802 = vmatprep.subr.mxu0 0.0
    %803 = vmatpush1.msra.mxu0 0.0
    %804 = vmatprep.subr.mxu0 0.0
    %805 = vmatpush1.msra.mxu0 0.0
    %806 = vmatprep.subr.mxu0 0.0
    %807 = vmatpush1.msra.mxu0 0.0
    %808 = vmatprep.subr.mxu0 0.0
    %809 = vmatpush1.msra.mxu0 0.0
    %810 = vmatprep.subr.mxu0 0.0
    %811 = vmatpush1.msra.mxu0 0.0
    %812 = vmatprep.subr.mxu0 0.0
    %813 = vmatpush1.msra.mxu0 0.0
    %814 = vmatprep.subr.mxu0 0.0
    %815 = vmatpush1.msra.mxu0 0.0
    %816 = vmatprep.subr.mxu0 0.0
    %817 = vmatpush1.msra.mxu0 0.0
    %818 = vmatprep.subr.mxu0 0.0
    %819 = vmatpush1.msra.mxu0 0.0
    %820 = vmatprep.subr.mxu0 0.0
    %821 = vmatpush1.msra.mxu0 0.0
    %822 = vmatprep.subr.mxu0 0.0
    %823 = vmatpush1.msra.mxu0 0.0
    %824 = vmatprep.subr.mxu0 0.0
    %825 = vmatpush1.msra.mxu0 0.0
    %826 = vmatprep.mubr.f32.mxu0 0.0
    %827 = vmatmul.mubr.f32.gmra.mrb[0].mxu0 %v757
    %v828 = vpop.f32.mrb[0].mxu0
    %v829 = vadd.f32 0.0, %v828
    %v830 = vpop.f32.mrb[0].mxu0
    %831 = vmatprep.mubr.f32.mxu0 0.0
    %832 = vmatmul.mubr.f32.gmra.mrb[0].mxu0 %v760
    %v833 = vpop.f32.mrb[0].mxu0
    %v834 = vadd.f32 0.0, %v833
    %v835 = vpop.f32.mrb[0].mxu0
    %836 = vdwg.mxu0
    %v837 = vadd.f32 %v744, %v829
    %v838 = vadd.f32 %v749, %v834
    %v839 = vld [vmem:[%s6] sm:$0x1]
    %v841 = vlaneseq
    %v842 = vshrl.u32 %v841, 7
    %v843 = vsub.s32 0, %v842
    %v844 = vrot.slane %v839, %v843
    %v846 = vadd.f32 %v837, %v844
    %v847 = vadd.f32 %v838, %v844
    %v848 = vsel %vm92, %v846, 0.0
    %849 = vadd.xlane.f32.xlu0 %v848
    %v850 = vpop.xlane.xlu0 %849
    %v851 = vsel %vm92, %v847, 0.0
    %852 = vadd.xlane.f32.xlu0 %v851
    %v853 = vpop.xlane.xlu0 %852
    %v854 = vmul.f32 %v850, %v507
    %v855 = vmul.f32 %v853, %v507
    %v856 = vsub.f32 %v846, %v854
    %v857 = vsub.f32 %v847, %v855
    %v858 = vmul.f32 %v856, %v856
    %v859 = vmul.f32 %v857, %v857
    %v860 = vsel %vm92, %v858, 0.0
    %861 = vadd.xlane.f32.xlu0 %v860
    %v862 = vpop.xlane.xlu0 %861
    %v863 = vsel %vm92, %v859, 0.0
    %864 = vadd.xlane.f32.xlu0 %v863
    %v865 = vpop.xlane.xlu0 %864
    %v866 = vmul.f32 %v862, %v507
    %v867 = vmul.f32 %v865, %v507
    %v868 = vadd.f32 %v866, 1e-06
    %v869 = vadd.f32 %v867, 1e-06
    %v870 = vrsqrt.pop %v868
    %v871 = vrsqrt.pop %v869
    %v872 = vmul.f32 %v856, %v870
    %v873 = vmul.f32 %v857, %v871
    %v874 = vld [vmem:[%s9] sm:$0x1]
    %v876 = vlaneseq
    %v877 = vshrl.u32 %v876, 7
    %v878 = vsub.s32 0, %v877
    %v879 = vrot.slane %v874, %v878
    %v881 = vmul.f32 %v872, %v879
    %v882 = vmul.f32 %v873, %v879
    %v883 = vld [vmem:[%s10] sm:$0x1]
    %v885 = vlaneseq
    %v886 = vshrl.u32 %v885, 7
    %v887 = vsub.s32 0, %v886
    %v888 = vrot.slane %v883, %v887
    %v890 = vadd.f32 %v881, %v888
    %v891 = vadd.f32 %v882, %v888
    %v892 = vmax.f32 %v890, 0.0
    %v893 = vmax.f32 %v891, 0.0
    %894 = vst.msk [vmem:[#allocation4 + $0x30] sm:$0xff] %vm92, %v892
    %895 = vst.msk [vmem:[#allocation4 + $0x38] sm:$0xff] %vm92, %v893
    %896 = vst.msk [vmem:[#allocation3] sm:$0xff] %vm194, 0.0
    %897 = vst.msk [vmem:[#allocation3 + $0x8] sm:$0xff] %vm194, 0.0
    %898 = vst.msk [vmem:[#allocation3 + $0x10] sm:$0xff] %vm194, 0.0
    %899 = vst.msk [vmem:[#allocation3 + $0x18] sm:$0xff] %vm194, 0.0
    %900 = vst.msk [vmem:[#allocation3 + $0x20] sm:$0xf] %vm199, 0.0
    %v901 = vld [vmem:[%s2] sm:$0xff]
    %v902 = vld [vmem:[%s2 + $0x8] sm:$0xf]
    %903 = vst.msk [vmem:[#allocation3 + $0x3] sm:$0xff] %vm194, %v901
    %904 = vst.msk [vmem:[#allocation3 + $0xb] sm:$0xf] %vm199, %v902
    %v905 = vld [vmem:[#allocation3 + $0x1] sm:$0xff]
    %v906 = vld [vmem:[#allocation3 + $0x9] sm:$0xff]
    %v907 = vand.u32 2147483647, %v905
    %v908 = vand.u32 2147483647, %v906
    %v909 = vsel %vm194, %v907, 0.0
    %910 = vadd.xlane.f32.xlu0 %v909
    %v911 = vpop.xlane.xlu0 %910
    %v912 = vsel %vm194, %v908, 0.0
    %913 = vadd.xlane.f32.xlu0 %v912
    %v914 = vpop.xlane.xlu0 %913
    %vm915 = vcmp.eq.f32.partialorder %v911, 0.0
    %vm916 = vcmp.eq.f32.partialorder %v914, 0.0
    %vm917 = vmand %vm915, %vm80
    %vm918 = vmand %vm916, %vm81
    %v919 = vsel %vm917, 1, 0
    %v920 = vsel %vm918, 1, 0
    %921 = vset.pattern.permute.xlu0 0
    %922 = vperm.xlu0 %921, %v919
    %v923 = vpop.permute.xlu0 %922
    %924 = vset.pattern.permute.xlu0 0
    %925 = vperm.xlu0 %924, %v920
    %v926 = vpop.permute.xlu0 %925
    %vm927 = vcmp.eq.s32.totalorder %v923, 1
    %vm928 = vcmp.eq.s32.totalorder %v926, 1
    %v929 = vsel %vm927, 1e-06, %v905
    %v930 = vsel %vm928, 1e-06, %v906
    %931 = vst.msk [vmem:[#allocation3 + $0x1] sm:$0xff] %vm194, %v929
    %932 = vst.msk [vmem:[#allocation3 + $0x9] sm:$0xff] %vm194, %v930
    %v933 = vld [vmem:[#allocation3] sm:$0xff]
    %v934 = vld [vmem:[#allocation3 + $0x8] sm:$0xff]
    %v935 = vld [vmem:[%s7] sm:$0xff]
    %v936 = vld [vmem:[%s7 + $0x8] sm:$0xff]
    %v937 = vld [vmem:[#allocation3 + $0x1] sm:$0xff]
    %v938 = vld [vmem:[#allocation3 + $0x9] sm:$0xff]
    %s939 = scalar_lea.vmem %s7, 16
    %v940 = vld [vmem:[%s939] sm:$0xff]
    %v941 = vld [vmem:[%s939 + $0x8] sm:$0xff]
    %v943 = vsel %vm194, %v937, 0
    %v946 = vsel %vm194, %v938, 0
    %948 = vmatprep.subr.mxu0 0.0
    %949 = vmatpush1.msra.mxu0 %v940
    %950 = vmatprep.subr.mxu0 0.0
    %951 = vmatpush1.msra.mxu0 %v941
    %952 = vmatprep.subr.mxu0 0.0
    %953 = vmatpush1.msra.mxu0 0.0
    %954 = vmatprep.subr.mxu0 0.0
    %955 = vmatpush1.msra.mxu0 0.0
    %956 = vmatprep.subr.mxu0 0.0
    %957 = vmatpush1.msra.mxu0 0.0
    %958 = vmatprep.subr.mxu0 0.0
    %959 = vmatpush1.msra.mxu0 0.0
    %960 = vmatprep.subr.mxu0 0.0
    %961 = vmatpush1.msra.mxu0 0.0
    %962 = vmatprep.subr.mxu0 0.0
    %963 = vmatpush1.msra.mxu0 0.0
    %964 = vmatprep.subr.mxu0 0.0
    %965 = vmatpush1.msra.mxu0 0.0
    %966 = vmatprep.subr.mxu0 0.0
    %967 = vmatpush1.msra.mxu0 0.0
    %968 = vmatprep.subr.mxu0 0.0
    %969 = vmatpush1.msra.mxu0 0.0
    %970 = vmatprep.subr.mxu0 0.0
    %971 = vmatpush1.msra.mxu0 0.0
    %972 = vmatprep.subr.mxu0 0.0
    %973 = vmatpush1.msra.mxu0 0.0
    %974 = vmatprep.subr.mxu0 0.0
    %975 = vmatpush1.msra.mxu0 0.0
    %976 = vmatprep.subr.mxu0 0.0
    %977 = vmatpush1.msra.mxu0 0.0
    %978 = vmatprep.subr.mxu0 0.0
    %979 = vmatpush1.msra.mxu0 0.0
    %980 = vmatprep.subr.mxu0 0.0
    %981 = vmatpush1.msra.mxu0 0.0
    %982 = vmatprep.subr.mxu0 0.0
    %983 = vmatpush1.msra.mxu0 0.0
    %984 = vmatprep.subr.mxu0 0.0
    %985 = vmatpush1.msra.mxu0 0.0
    %986 = vmatprep.subr.mxu0 0.0
    %987 = vmatpush1.msra.mxu0 0.0
    %988 = vmatprep.subr.mxu0 0.0
    %989 = vmatpush1.msra.mxu0 0.0
    %990 = vmatprep.subr.mxu0 0.0
    %991 = vmatpush1.msra.mxu0 0.0
    %992 = vmatprep.subr.mxu0 0.0
    %993 = vmatpush1.msra.mxu0 0.0
    %994 = vmatprep.subr.mxu0 0.0
    %995 = vmatpush1.msra.mxu0 0.0
    %996 = vmatprep.subr.mxu0 0.0
    %997 = vmatpush1.msra.mxu0 0.0
    %998 = vmatprep.subr.mxu0 0.0
    %999 = vmatpush1.msra.mxu0 0.0
    %1000 = vmatprep.subr.mxu0 0.0
    %1001 = vmatpush1.msra.mxu0 0.0
    %1002 = vmatprep.subr.mxu0 0.0
    %1003 = vmatpush1.msra.mxu0 0.0
    %1004 = vmatprep.subr.mxu0 0.0
    %1005 = vmatpush1.msra.mxu0 0.0
    %1006 = vmatprep.subr.mxu0 0.0
    %1007 = vmatpush1.msra.mxu0 0.0
    %1008 = vmatprep.subr.mxu0 0.0
    %1009 = vmatpush1.msra.mxu0 0.0
    %1010 = vmatprep.subr.mxu0 0.0
    %1011 = vmatpush1.msra.mxu0 0.0
    %1012 = vmatprep.mubr.f32.mxu0 0.0
    %1013 = vmatmul.mubr.f32.gmra.mrb[0].mxu0 %v943
    %v1014 = vpop.f32.mrb[0].mxu0
    %v1015 = vadd.f32 0.0, %v1014
    %v1016 = vpop.f32.mrb[0].mxu0
    %1017 = vmatprep.mubr.f32.mxu0 0.0
    %1018 = vmatmul.mubr.f32.gmra.mrb[0].mxu0 %v946
    %v1019 = vpop.f32.mrb[0].mxu0
    %v1020 = vadd.f32 0.0, %v1019
    %v1021 = vpop.f32.mrb[0].mxu0
    %1022 = vdwg.mxu0
    %v1024 = vsel %vm194, %v933, 0
    %v1027 = vsel %vm194, %v934, 0
    %1029 = vmatprep.subr.mxu0 0.0
    %1030 = vmatpush1.msra.mxu0 %v935
    %1031 = vmatprep.subr.mxu0 0.0
    %1032 = vmatpush1.msra.mxu0 %v936
    %1033 = vmatprep.subr.mxu0 0.0
    %1034 = vmatpush1.msra.mxu0 0.0
    %1035 = vmatprep.subr.mxu0 0.0
    %1036 = vmatpush1.msra.mxu0 0.0
    %1037 = vmatprep.subr.mxu0 0.0
    %1038 = vmatpush1.msra.mxu0 0.0
    %1039 = vmatprep.subr.mxu0 0.0
    %1040 = vmatpush1.msra.mxu0 0.0
    %1041 = vmatprep.subr.mxu0 0.0
    %1042 = vmatpush1.msra.mxu0 0.0
    %1043 = vmatprep.subr.mxu0 0.0
    %1044 = vmatpush1.msra.mxu0 0.0
    %1045 = vmatprep.subr.mxu0 0.0
    %1046 = vmatpush1.msra.mxu0 0.0
    %1047 = vmatprep.subr.mxu0 0.0
    %1048 = vmatpush1.msra.mxu0 0.0
    %1049 = vmatprep.subr.mxu0 0.0
    %1050 = vmatpush1.msra.mxu0 0.0
    %1051 = vmatprep.subr.mxu0 0.0
    %1052 = vmatpush1.msra.mxu0 0.0
    %1053 = vmatprep.subr.mxu0 0.0
    %1054 = vmatpush1.msra.mxu0 0.0
    %1055 = vmatprep.subr.mxu0 0.0
    %1056 = vmatpush1.msra.mxu0 0.0
    %1057 = vmatprep.subr.mxu0 0.0
    %1058 = vmatpush1.msra.mxu0 0.0
    %1059 = vmatprep.subr.mxu0 0.0
    %1060 = vmatpush1.msra.mxu0 0.0
    %1061 = vmatprep.subr.mxu0 0.0
    %1062 = vmatpush1.msra.mxu0 0.0
    %1063 = vmatprep.subr.mxu0 0.0
    %1064 = vmatpush1.msra.mxu0 0.0
    %1065 = vmatprep.subr.mxu0 0.0
    %1066 = vmatpush1.msra.mxu0 0.0
    %1067 = vmatprep.subr.mxu0 0.0
    %1068 = vmatpush1.msra.mxu0 0.0
    %1069 = vmatprep.subr.mxu0 0.0
    %1070 = vmatpush1.msra.mxu0 0.0
    %1071 = vmatprep.subr.mxu0 0.0
    %1072 = vmatpush1.msra.mxu0 0.0
    %1073 = vmatprep.subr.mxu0 0.0
    %1074 = vmatpush1.msra.mxu0 0.0
    %1075 = vmatprep.subr.mxu0 0.0
    %1076 = vmatpush1.msra.mxu0 0.0
    %1077 = vmatprep.subr.mxu0 0.0
    %1078 = vmatpush1.msra.mxu0 0.0
    %1079 = vmatprep.subr.mxu0 0.0
    %1080 = vmatpush1.msra.mxu0 0.0
    %1081 = vmatprep.subr.mxu0 0.0
    %1082 = vmatpush1.msra.mxu0 0.0
    %1083 = vmatprep.subr.mxu0 0.0
    %1084 = vmatpush1.msra.mxu0 0.0
    %1085 = vmatprep.subr.mxu0 0.0
    %1086 = vmatpush1.msra.mxu0 0.0
    %1087 = vmatprep.subr.mxu0 0.0
    %1088 = vmatpush1.msra.mxu0 0.0
    %1089 = vmatprep.subr.mxu0 0.0
    %1090 = vmatpush1.msra.mxu0 0.0
    %1091 = vmatprep.subr.mxu0 0.0
    %1092 = vmatpush1.msra.mxu0 0.0
    %1093 = vmatprep.mubr.f32.mxu0 0.0
    %1094 = vmatmul.mubr.f32.gmra.mrb[0].mxu0 %v1024
    %v1095 = vpop.f32.mrb[0].mxu0
    %v1096 = vadd.f32 %v1015, %v1095
    %v1097 = vpop.f32.mrb[0].mxu0
    %1098 = vmatprep.mubr.f32.mxu0 0.0
    %1099 = vmatmul.mubr.f32.gmra.mrb[0].mxu0 %v1027
    %v1100 = vpop.f32.mrb[0].mxu0
    %v1101 = vadd.f32 %v1020, %v1100
    %v1102 = vpop.f32.mrb[0].mxu0
    %1103 = vdwg.mxu0
    %v1104 = vld [vmem:[#allocation3 + $0x2] sm:$0xff]
    %v1105 = vld [vmem:[#allocation3 + $0xa] sm:$0xff]
    %s1106 = scalar_lea.vmem %s7, 32
    %v1107 = vld [vmem:[%s1106] sm:$0xff]
    %v1108 = vld [vmem:[%s1106 + $0x8] sm:$0xff]
    %v1110 = vsel %vm194, %v1104, 0
    %v1113 = vsel %vm194, %v1105, 0
    %1115 = vmatprep.subr.mxu0 0.0
    %1116 = vmatpush1.msra.mxu0 %v1107
    %1117 = vmatprep.subr.mxu0 0.0
    %1118 = vmatpush1.msra.mxu0 %v1108
    %1119 = vmatprep.subr.mxu0 0.0
    %1120 = vmatpush1.msra.mxu0 0.0
    %1121 = vmatprep.subr.mxu0 0.0
    %1122 = vmatpush1.msra.mxu0 0.0
    %1123 = vmatprep.subr.mxu0 0.0
    %1124 = vmatpush1.msra.mxu0 0.0
    %1125 = vmatprep.subr.mxu0 0.0
    %1126 = vmatpush1.msra.mxu0 0.0
    %1127 = vmatprep.subr.mxu0 0.0
    %1128 = vmatpush1.msra.mxu0 0.0
    %1129 = vmatprep.subr.mxu0 0.0
    %1130 = vmatpush1.msra.mxu0 0.0
    %1131 = vmatprep.subr.mxu0 0.0
    %1132 = vmatpush1.msra.mxu0 0.0
    %1133 = vmatprep.subr.mxu0 0.0
    %1134 = vmatpush1.msra.mxu0 0.0
    %1135 = vmatprep.subr.mxu0 0.0
    %1136 = vmatpush1.msra.mxu0 0.0
    %1137 = vmatprep.subr.mxu0 0.0
    %1138 = vmatpush1.msra.mxu0 0.0
    %1139 = vmatprep.subr.mxu0 0.0
    %1140 = vmatpush1.msra.mxu0 0.0
    %1141 = vmatprep.subr.mxu0 0.0
    %1142 = vmatpush1.msra.mxu0 0.0
    %1143 = vmatprep.subr.mxu0 0.0
    %1144 = vmatpush1.msra.mxu0 0.0
    %1145 = vmatprep.subr.mxu0 0.0
    %1146 = vmatpush1.msra.mxu0 0.0
    %1147 = vmatprep.subr.mxu0 0.0
    %1148 = vmatpush1.msra.mxu0 0.0
    %1149 = vmatprep.subr.mxu0 0.0
    %1150 = vmatpush1.msra.mxu0 0.0
    %1151 = vmatprep.subr.mxu0 0.0
    %1152 = vmatpush1.msra.mxu0 0.0
    %1153 = vmatprep.subr.mxu0 0.0
    %1154 = vmatpush1.msra.mxu0 0.0
    %1155 = vmatprep.subr.mxu0 0.0
    %1156 = vmatpush1.msra.mxu0 0.0
    %1157 = vmatprep.subr.mxu0 0.0
    %1158 = vmatpush1.msra.mxu0 0.0
    %1159 = vmatprep.subr.mxu0 0.0
    %1160 = vmatpush1.msra.mxu0 0.0
    %1161 = vmatprep.subr.mxu0 0.0
    %1162 = vmatpush1.msra.mxu0 0.0
    %1163 = vmatprep.subr.mxu0 0.0
    %1164 = vmatpush1.msra.mxu0 0.0
    %1165 = vmatprep.subr.mxu0 0.0
    %1166 = vmatpush1.msra.mxu0 0.0
    %1167 = vmatprep.subr.mxu0 0.0
    %1168 = vmatpush1.msra.mxu0 0.0
    %1169 = vmatprep.subr.mxu0 0.0
    %1170 = vmatpush1.msra.mxu0 0.0
    %1171 = vmatprep.subr.mxu0 0.0
    %1172 = vmatpush1.msra.mxu0 0.0
    %1173 = vmatprep.subr.mxu0 0.0
    %1174 = vmatpush1.msra.mxu0 0.0
    %1175 = vmatprep.subr.mxu0 0.0
    %1176 = vmatpush1.msra.mxu0 0.0
    %1177 = vmatprep.subr.mxu0 0.0
    %1178 = vmatpush1.msra.mxu0 0.0
    %1179 = vmatprep.mubr.f32.mxu0 0.0
    %1180 = vmatmul.mubr.f32.gmra.mrb[0].mxu0 %v1110
    %v1181 = vpop.f32.mrb[0].mxu0
    %v1182 = vadd.f32 0.0, %v1181
    %v1183 = vpop.f32.mrb[0].mxu0
    %1184 = vmatprep.mubr.f32.mxu0 0.0
    %1185 = vmatmul.mubr.f32.gmra.mrb[0].mxu0 %v1113
    %v1186 = vpop.f32.mrb[0].mxu0
    %v1187 = vadd.f32 0.0, %v1186
    %v1188 = vpop.f32.mrb[0].mxu0
    %1189 = vdwg.mxu0
    %v1190 = vadd.f32 %v1096, %v1182
    %v1191 = vadd.f32 %v1101, %v1187
    %v1192 = vld [vmem:[%s8] sm:$0x1]
    %v1194 = vlaneseq
    %v1195 = vshrl.u32 %v1194, 7
    %v1196 = vsub.s32 0, %v1195
    %v1197 = vrot.slane %v1192, %v1196
    %v1199 = vadd.f32 %v1190, %v1197
    %v1200 = vadd.f32 %v1191, %v1197
    %v1201 = vsel %vm92, %v1199, 0.0
    %1202 = vadd.xlane.f32.xlu0 %v1201
    %v1203 = vpop.xlane.xlu0 %1202
    %v1204 = vsel %vm92, %v1200, 0.0
    %1205 = vadd.xlane.f32.xlu0 %v1204
    %v1206 = vpop.xlane.xlu0 %1205
    %v1207 = vmul.f32 %v1203, %v507
    %v1208 = vmul.f32 %v1206, %v507
    %v1209 = vsub.f32 %v1199, %v1207
    %v1210 = vsub.f32 %v1200, %v1208
    %v1211 = vmul.f32 %v1209, %v1209
    %v1212 = vmul.f32 %v1210, %v1210
    %v1213 = vsel %vm92, %v1211, 0.0
    %1214 = vadd.xlane.f32.xlu0 %v1213
    %v1215 = vpop.xlane.xlu0 %1214
    %v1216 = vsel %vm92, %v1212, 0.0
    %1217 = vadd.xlane.f32.xlu0 %v1216
    %v1218 = vpop.xlane.xlu0 %1217
    %v1219 = vmul.f32 %v1215, %v507
    %v1220 = vmul.f32 %v1218, %v507
    %v1221 = vadd.f32 %v1219, 1e-06
    %v1222 = vadd.f32 %v1220, 1e-06
    %v1223 = vrsqrt.pop %v1221
    %v1224 = vrsqrt.pop %v1222
    %v1225 = vmul.f32 %v1209, %v1223
    %v1226 = vmul.f32 %v1210, %v1224
    %v1227 = vld [vmem:[%s11] sm:$0x1]
    %v1229 = vlaneseq
    %v1230 = vshrl.u32 %v1229, 7
    %v1231 = vsub.s32 0, %v1230
    %v1232 = vrot.slane %v1227, %v1231
    %v1234 = vmul.f32 %v1225, %v1232
    %v1235 = vmul.f32 %v1226, %v1232
    %v1236 = vld [vmem:[%s12] sm:$0x1]
    %v1238 = vlaneseq
    %v1239 = vshrl.u32 %v1238, 7
    %v1240 = vsub.s32 0, %v1239
    %v1241 = vrot.slane %v1236, %v1240
    %v1243 = vadd.f32 %v1234, %v1241
    %v1244 = vadd.f32 %v1235, %v1241
    %v1245 = vmax.f32 %v1243, 0.0
    %v1246 = vmax.f32 %v1244, 0.0
    %1247 = vst.msk [vmem:[#allocation4 + $0x40] sm:$0xff] %vm92, %v1245
    %1248 = vst.msk [vmem:[#allocation4 + $0x48] sm:$0xff] %vm92, %v1246
    %v1249 = vld [vmem:[%s2 + $0xc] sm:$0xff]
    %v1250 = vld [vmem:[%s2 + $0x14] sm:$0xf]
    %1251 = vst.msk [vmem:[#allocation3 + $0x15] sm:$0xff] %vm194, %v1249
    %1252 = vst.msk [vmem:[#allocation3 + $0x1d] sm:$0xf] %vm199, %v1250
    %v1253 = vld [vmem:[#allocation3 + $0x13] sm:$0xff]
    %v1254 = vld [vmem:[#allocation3 + $0x1b] sm:$0xff]
    %v1255 = vand.u32 2147483647, %v1253
    %v1256 = vand.u32 2147483647, %v1254
    %v1257 = vsel %vm194, %v1255, 0.0
    %1258 = vadd.xlane.f32.xlu0 %v1257
    %v1259 = vpop.xlane.xlu0 %1258
    %v1260 = vsel %vm194, %v1256, 0.0
    %1261 = vadd.xlane.f32.xlu0 %v1260
    %v1262 = vpop.xlane.xlu0 %1261
    %vm1263 = vcmp.eq.f32.partialorder %v1259, 0.0
    %vm1264 = vcmp.eq.f32.partialorder %v1262, 0.0
    %vm1265 = vmand %vm1263, %vm82
    %vm1266 = vmand %vm1264, %vm83
    %v1267 = vsel %vm1265, 1, 0
    %v1268 = vsel %vm1266, 1, 0
    %1269 = vset.pattern.permute.xlu0 0
    %1270 = vperm.xlu0 %1269, %v1267
    %v1271 = vpop.permute.xlu0 %1270
    %1272 = vset.pattern.permute.xlu0 0
    %1273 = vperm.xlu0 %1272, %v1268
    %v1274 = vpop.permute.xlu0 %1273
    %vm1275 = vcmp.eq.s32.totalorder %v1271, 1
    %vm1276 = vcmp.eq.s32.totalorder %v1274, 1
    %v1277 = vsel %vm1275, 1e-06, %v1253
    %v1278 = vsel %vm1276, 1e-06, %v1254
    %1279 = vst.msk [vmem:[#allocation3 + $0x13] sm:$0xff] %vm194, %v1277
    %1280 = vst.msk [vmem:[#allocation3 + $0x1b] sm:$0xff] %vm194, %v1278
    %v1281 = vld [vmem:[#allocation3 + $0x12] sm:$0xff]
    %v1282 = vld [vmem:[#allocation3 + $0x1a] sm:$0xff]
    %v1283 = vld [vmem:[%s7] sm:$0xff]
    %v1284 = vld [vmem:[%s7 + $0x8] sm:$0xff]
    %v1285 = vld [vmem:[#allocation3 + $0x13] sm:$0xff]
    %v1286 = vld [vmem:[#allocation3 + $0x1b] sm:$0xff]
    %v1287 = vld [vmem:[%s939] sm:$0xff]
    %v1288 = vld [vmem:[%s939 + $0x8] sm:$0xff]
    %v1290 = vsel %vm194, %v1285, 0
    %v1293 = vsel %vm194, %v1286, 0
    %1295 = vmatprep.subr.mxu0 0.0
    %1296 = vmatpush1.msra.mxu0 %v1287
    %1297 = vmatprep.subr.mxu0 0.0
    %1298 = vmatpush1.msra.mxu0 %v1288
    %1299 = vmatprep.subr.mxu0 0.0
    %1300 = vmatpush1.msra.mxu0 0.0
    %1301 = vmatprep.subr.mxu0 0.0
    %1302 = vmatpush1.msra.mxu0 0.0
    %1303 = vmatprep.subr.mxu0 0.0
    %1304 = vmatpush1.msra.mxu0 0.0
    %1305 = vmatprep.subr.mxu0 0.0
    %1306 = vmatpush1.msra.mxu0 0.0
    %1307 = vmatprep.subr.mxu0 0.0
    %1308 = vmatpush1.msra.mxu0 0.0
    %1309 = vmatprep.subr.mxu0 0.0
    %1310 = vmatpush1.msra.mxu0 0.0
    %1311 = vmatprep.subr.mxu0 0.0
    %1312 = vmatpush1.msra.mxu0 0.0
    %1313 = vmatprep.subr.mxu0 0.0
    %1314 = vmatpush1.msra.mxu0 0.0
    %1315 = vmatprep.subr.mxu0 0.0
    %1316 = vmatpush1.msra.mxu0 0.0
    %1317 = vmatprep.subr.mxu0 0.0
    %1318 = vmatpush1.msra.mxu0 0.0
    %1319 = vmatprep.subr.mxu0 0.0
    %1320 = vmatpush1.msra.mxu0 0.0
    %1321 = vmatprep.subr.mxu0 0.0
    %1322 = vmatpush1.msra.mxu0 0.0
    %1323 = vmatprep.subr.mxu0 0.0
    %1324 = vmatpush1.msra.mxu0 0.0
    %1325 = vmatprep.subr.mxu0 0.0
    %1326 = vmatpush1.msra.mxu0 0.0
    %1327 = vmatprep.subr.mxu0 0.0
    %1328 = vmatpush1.msra.mxu0 0.0
    %1329 = vmatprep.subr.mxu0 0.0
    %1330 = vmatpush1.msra.mxu0 0.0
    %1331 = vmatprep.subr.mxu0 0.0
    %1332 = vmatpush1.msra.mxu0 0.0
    %1333 = vmatprep.subr.mxu0 0.0
    %1334 = vmatpush1.msra.mxu0 0.0
    %1335 = vmatprep.subr.mxu0 0.0
    %1336 = vmatpush1.msra.mxu0 0.0
    %1337 = vmatprep.subr.mxu0 0.0
    %1338 = vmatpush1.msra.mxu0 0.0
    %1339 = vmatprep.subr.mxu0 0.0
    %1340 = vmatpush1.msra.mxu0 0.0
    %1341 = vmatprep.subr.mxu0 0.0
    %1342 = vmatpush1.msra.mxu0 0.0
    %1343 = vmatprep.subr.mxu0 0.0
    %1344 = vmatpush1.msra.mxu0 0.0
    %1345 = vmatprep.subr.mxu0 0.0
    %1346 = vmatpush1.msra.mxu0 0.0
    %1347 = vmatprep.subr.mxu0 0.0
    %1348 = vmatpush1.msra.mxu0 0.0
    %1349 = vmatprep.subr.mxu0 0.0
    %1350 = vmatpush1.msra.mxu0 0.0
    %1351 = vmatprep.subr.mxu0 0.0
    %1352 = vmatpush1.msra.mxu0 0.0
    %1353 = vmatprep.subr.mxu0 0.0
    %1354 = vmatpush1.msra.mxu0 0.0
    %1355 = vmatprep.subr.mxu0 0.0
    %1356 = vmatpush1.msra.mxu0 0.0
    %1357 = vmatprep.subr.mxu0 0.0
    %1358 = vmatpush1.msra.mxu0 0.0
    %1359 = vmatprep.mubr.f32.mxu0 0.0
    %1360 = vmatmul.mubr.f32.gmra.mrb[0].mxu0 %v1290
    %v1361 = vpop.f32.mrb[0].mxu0
    %v1362 = vadd.f32 0.0, %v1361
    %v1363 = vpop.f32.mrb[0].mxu0
    %1364 = vmatprep.mubr.f32.mxu0 0.0
    %1365 = vmatmul.mubr.f32.gmra.mrb[0].mxu0 %v1293
    %v1366 = vpop.f32.mrb[0].mxu0
    %v1367 = vadd.f32 0.0, %v1366
    %v1368 = vpop.f32.mrb[0].mxu0
    %1369 = vdwg.mxu0
    %v1371 = vsel %vm194, %v1281, 0
    %v1374 = vsel %vm194, %v1282, 0
    %1376 = vmatprep.subr.mxu0 0.0
    %1377 = vmatpush1.msra.mxu0 %v1283
    %1378 = vmatprep.subr.mxu0 0.0
    %1379 = vmatpush1.msra.mxu0 %v1284
    %1380 = vmatprep.subr.mxu0 0.0
    %1381 = vmatpush1.msra.mxu0 0.0
    %1382 = vmatprep.subr.mxu0 0.0
    %1383 = vmatpush1.msra.mxu0 0.0
    %1384 = vmatprep.subr.mxu0 0.0
    %1385 = vmatpush1.msra.mxu0 0.0
    %1386 = vmatprep.subr.mxu0 0.0
    %1387 = vmatpush1.msra.mxu0 0.0
    %1388 = vmatprep.subr.mxu0 0.0
    %1389 = vmatpush1.msra.mxu0 0.0
    %1390 = vmatprep.subr.mxu0 0.0
    %1391 = vmatpush1.msra.mxu0 0.0
    %1392 = vmatprep.subr.mxu0 0.0
    %1393 = vmatpush1.msra.mxu0 0.0
    %1394 = vmatprep.subr.mxu0 0.0
    %1395 = vmatpush1.msra.mxu0 0.0
    %1396 = vmatprep.subr.mxu0 0.0
    %1397 = vmatpush1.msra.mxu0 0.0
    %1398 = vmatprep.subr.mxu0 0.0
    %1399 = vmatpush1.msra.mxu0 0.0
    %1400 = vmatprep.subr.mxu0 0.0
    %1401 = vmatpush1.msra.mxu0 0.0
    %1402 = vmatprep.subr.mxu0 0.0
    %1403 = vmatpush1.msra.mxu0 0.0
    %1404 = vmatprep.subr.mxu0 0.0
    %1405 = vmatpush1.msra.mxu0 0.0
    %1406 = vmatprep.subr.mxu0 0.0
    %1407 = vmatpush1.msra.mxu0 0.0
    %1408 = vmatprep.subr.mxu0 0.0
    %1409 = vmatpush1.msra.mxu0 0.0
    %1410 = vmatprep.subr.mxu0 0.0
    %1411 = vmatpush1.msra.mxu0 0.0
    %1412 = vmatprep.subr.mxu0 0.0
    %1413 = vmatpush1.msra.mxu0 0.0
    %1414 = vmatprep.subr.mxu0 0.0
    %1415 = vmatpush1.msra.mxu0 0.0
    %1416 = vmatprep.subr.mxu0 0.0
    %1417 = vmatpush1.msra.mxu0 0.0
    %1418 = vmatprep.subr.mxu0 0.0
    %1419 = vmatpush1.msra.mxu0 0.0
    %1420 = vmatprep.subr.mxu0 0.0
    %1421 = vmatpush1.msra.mxu0 0.0
    %1422 = vmatprep.subr.mxu0 0.0
    %1423 = vmatpush1.msra.mxu0 0.0
    %1424 = vmatprep.subr.mxu0 0.0
    %1425 = vmatpush1.msra.mxu0 0.0
    %1426 = vmatprep.subr.mxu0 0.0
    %1427 = vmatpush1.msra.mxu0 0.0
    %1428 = vmatprep.subr.mxu0 0.0
    %1429 = vmatpush1.msra.mxu0 0.0
    %1430 = vmatprep.subr.mxu0 0.0
    %1431 = vmatpush1.msra.mxu0 0.0
    %1432 = vmatprep.subr.mxu0 0.0
    %1433 = vmatpush1.msra.mxu0 0.0
    %1434 = vmatprep.subr.mxu0 0.0
    %1435 = vmatpush1.msra.mxu0 0.0
    %1436 = vmatprep.subr.mxu0 0.0
    %1437 = vmatpush1.msra.mxu0 0.0
    %1438 = vmatprep.subr.mxu0 0.0
    %1439 = vmatpush1.msra.mxu0 0.0
    %1440 = vmatprep.mubr.f32.mxu0 0.0
    %1441 = vmatmul.mubr.f32.gmra.mrb[0].mxu0 %v1371
    %v1442 = vpop.f32.mrb[0].mxu0
    %v1443 = vadd.f32 %v1362, %v1442
    %v1444 = vpop.f32.mrb[0].mxu0
    %1445 = vmatprep.mubr.f32.mxu0 0.0
    %1446 = vmatmul.mubr.f32.gmra.mrb[0].mxu0 %v1374
    %v1447 = vpop.f32.mrb[0].mxu0
    %v1448 = vadd.f32 %v1367, %v1447
    %v1449 = vpop.f32.mrb[0].mxu0
    %1450 = vdwg.mxu0
    %v1451 = vld [vmem:[#allocation3 + $0x14] sm:$0xff]
    %v1452 = vld [vmem:[#allocation3 + $0x1c] sm:$0xff]
    %v1453 = vld [vmem:[%s1106] sm:$0xff]
    %v1454 = vld [vmem:[%s1106 + $0x8] sm:$0xff]
    %v1456 = vsel %vm194, %v1451, 0
    %v1459 = vsel %vm194, %v1452, 0
    %1461 = vmatprep.subr.mxu0 0.0
    %1462 = vmatpush1.msra.mxu0 %v1453
    %1463 = vmatprep.subr.mxu0 0.0
    %1464 = vmatpush1.msra.mxu0 %v1454
    %1465 = vmatprep.subr.mxu0 0.0
    %1466 = vmatpush1.msra.mxu0 0.0
    %1467 = vmatprep.subr.mxu0 0.0
    %1468 = vmatpush1.msra.mxu0 0.0
    %1469 = vmatprep.subr.mxu0 0.0
    %1470 = vmatpush1.msra.mxu0 0.0
    %1471 = vmatprep.subr.mxu0 0.0
    %1472 = vmatpush1.msra.mxu0 0.0
    %1473 = vmatprep.subr.mxu0 0.0
    %1474 = vmatpush1.msra.mxu0 0.0
    %1475 = vmatprep.subr.mxu0 0.0
    %1476 = vmatpush1.msra.mxu0 0.0
    %1477 = vmatprep.subr.mxu0 0.0
    %1478 = vmatpush1.msra.mxu0 0.0
    %1479 = vmatprep.subr.mxu0 0.0
    %1480 = vmatpush1.msra.mxu0 0.0
    %1481 = vmatprep.subr.mxu0 0.0
    %1482 = vmatpush1.msra.mxu0 0.0
    %1483 = vmatprep.subr.mxu0 0.0
    %1484 = vmatpush1.msra.mxu0 0.0
    %1485 = vmatprep.subr.mxu0 0.0
    %1486 = vmatpush1.msra.mxu0 0.0
    %1487 = vmatprep.subr.mxu0 0.0
    %1488 = vmatpush1.msra.mxu0 0.0
    %1489 = vmatprep.subr.mxu0 0.0
    %1490 = vmatpush1.msra.mxu0 0.0
    %1491 = vmatprep.subr.mxu0 0.0
    %1492 = vmatpush1.msra.mxu0 0.0
    %1493 = vmatprep.subr.mxu0 0.0
    %1494 = vmatpush1.msra.mxu0 0.0
    %1495 = vmatprep.subr.mxu0 0.0
    %1496 = vmatpush1.msra.mxu0 0.0
    %1497 = vmatprep.subr.mxu0 0.0
    %1498 = vmatpush1.msra.mxu0 0.0
    %1499 = vmatprep.subr.mxu0 0.0
    %1500 = vmatpush1.msra.mxu0 0.0
    %1501 = vmatprep.subr.mxu0 0.0
    %1502 = vmatpush1.msra.mxu0 0.0
    %1503 = vmatprep.subr.mxu0 0.0
    %1504 = vmatpush1.msra.mxu0 0.0
    %1505 = vmatprep.subr.mxu0 0.0
    %1506 = vmatpush1.msra.mxu0 0.0
    %1507 = vmatprep.subr.mxu0 0.0
    %1508 = vmatpush1.msra.mxu0 0.0
    %1509 = vmatprep.subr.mxu0 0.0
    %1510 = vmatpush1.msra.mxu0 0.0
    %1511 = vmatprep.subr.mxu0 0.0
    %1512 = vmatpush1.msra.mxu0 0.0
    %1513 = vmatprep.subr.mxu0 0.0
    %1514 = vmatpush1.msra.mxu0 0.0
    %1515 = vmatprep.subr.mxu0 0.0
    %1516 = vmatpush1.msra.mxu0 0.0
    %1517 = vmatprep.subr.mxu0 0.0
    %1518 = vmatpush1.msra.mxu0 0.0
    %1519 = vmatprep.subr.mxu0 0.0
    %1520 = vmatpush1.msra.mxu0 0.0
    %1521 = vmatprep.subr.mxu0 0.0
    %1522 = vmatpush1.msra.mxu0 0.0
    %1523 = vmatprep.subr.mxu0 0.0
    %1524 = vmatpush1.msra.mxu0 0.0
    %1525 = vmatprep.mubr.f32.mxu0 0.0
    %1526 = vmatmul.mubr.f32.gmra.mrb[0].mxu0 %v1456
    %v1527 = vpop.f32.mrb[0].mxu0
    %v1528 = vadd.f32 0.0, %v1527
    %v1529 = vpop.f32.mrb[0].mxu0
    %1530 = vmatprep.mubr.f32.mxu0 0.0
    %1531 = vmatmul.mubr.f32.gmra.mrb[0].mxu0 %v1459
    %v1532 = vpop.f32.mrb[0].mxu0
    %v1533 = vadd.f32 0.0, %v1532
    %v1534 = vpop.f32.mrb[0].mxu0
    %1535 = vdwg.mxu0
    %v1536 = vadd.f32 %v1443, %v1528
    %v1537 = vadd.f32 %v1448, %v1533
    %v1538 = vld [vmem:[%s8] sm:$0x1]
    %v1540 = vlaneseq
    %v1541 = vshrl.u32 %v1540, 7
    %v1542 = vsub.s32 0, %v1541
    %v1543 = vrot.slane %v1538, %v1542
    %v1545 = vadd.f32 %v1536, %v1543
    %v1546 = vadd.f32 %v1537, %v1543
    %v1547 = vsel %vm92, %v1545, 0.0
    %1548 = vadd.xlane.f32.xlu0 %v1547
    %v1549 = vpop.xlane.xlu0 %1548
    %v1550 = vsel %vm92, %v1546, 0.0
    %1551 = vadd.xlane.f32.xlu0 %v1550
    %v1552 = vpop.xlane.xlu0 %1551
    %v1553 = vmul.f32 %v1549, %v507
    %v1554 = vmul.f32 %v1552, %v507
    %v1555 = vsub.f32 %v1545, %v1553
    %v1556 = vsub.f32 %v1546, %v1554
    %v1557 = vmul.f32 %v1555, %v1555
    %v1558 = vmul.f32 %v1556, %v1556
    %v1559 = vsel %vm92, %v1557, 0.0
    %1560 = vadd.xlane.f32.xlu0 %v1559
    %v1561 = vpop.xlane.xlu0 %1560
    %v1562 = vsel %vm92, %v1558, 0.0
    %1563 = vadd.xlane.f32.xlu0 %v1562
    %v1564 = vpop.xlane.xlu0 %1563
    %v1565 = vmul.f32 %v1561, %v507
    %v1566 = vmul.f32 %v1564, %v507
    %v1567 = vadd.f32 %v1565, 1e-06
    %v1568 = vadd.f32 %v1566, 1e-06
    %v1569 = vrsqrt.pop %v1567
    %v1570 = vrsqrt.pop %v1568
    %v1571 = vmul.f32 %v1555, %v1569
    %v1572 = vmul.f32 %v1556, %v1570
    %v1573 = vld [vmem:[%s11] sm:$0x1]
    %v1575 = vlaneseq
    %v1576 = vshrl.u32 %v1575, 7
    %v1577 = vsub.s32 0, %v1576
    %v1578 = vrot.slane %v1573, %v1577
    %v1580 = vmul.f32 %v1571, %v1578
    %v1581 = vmul.f32 %v1572, %v1578
    %v1582 = vld [vmem:[%s12] sm:$0x1]
    %v1584 = vlaneseq
    %v1585 = vshrl.u32 %v1584, 7
    %v1586 = vsub.s32 0, %v1585
    %v1587 = vrot.slane %v1582, %v1586
    %v1589 = vadd.f32 %v1580, %v1587
    %v1590 = vadd.f32 %v1581, %v1587
    %v1591 = vmax.f32 %v1589, 0.0
    %v1592 = vmax.f32 %v1590, 0.0
    %1593 = vst.msk [vmem:[#allocation4 + $0x50] sm:$0xff] %vm92, %v1591
    %1594 = vst.msk [vmem:[#allocation4 + $0x58] sm:$0xff] %vm92, %v1592
    %v1595 = vld [vmem:[#allocation4] sm:$0xff]
    %v1596 = vld [vmem:[#allocation4 + $0x8] sm:$0xff]
    %v1597 = vld [vmem:[#allocation4 + $0x10] sm:$0xff]
    %v1598 = vld [vmem:[#allocation4 + $0x18] sm:$0xff]
    %v1599 = vld [vmem:[#allocation4 + $0x20] sm:$0xff]
    %v1600 = vld [vmem:[#allocation4 + $0x28] sm:$0xff]
    %v1601 = vld [vmem:[#allocation4 + $0x30] sm:$0xff]
    %v1602 = vld [vmem:[#allocation4 + $0x38] sm:$0xff]
    %v1603 = vld [vmem:[#allocation4 + $0x40] sm:$0xff]
    %v1604 = vld [vmem:[#allocation4 + $0x48] sm:$0xff]
    %v1605 = vld [vmem:[#allocation4 + $0x50] sm:$0xff]
    %v1606 = vld [vmem:[#allocation4 + $0x58] sm:$0xff]
    %v1607 = vld [vmem:[%s13] sm:$0xff]
    %v1608 = vld [vmem:[%s13 + $0x8] sm:$0xff]
    %v1609 = vld [vmem:[%s13 + $0x10] sm:$0xff]
    %v1610 = vld [vmem:[%s13 + $0x18] sm:$0xff]
    %v1612 = vsel %vm92, %v1595, 0
    %v1615 = vsel %vm92, %v1596, 0
    %v1618 = vsel %vm92, %v1597, 0
    %v1621 = vsel %vm92, %v1598, 0
    %v1624 = vsel %vm92, %v1599, 0
    %v1627 = vsel %vm92, %v1600, 0
    %v1630 = vsel %vm92, %v1601, 0
    %v1633 = vsel %vm92, %v1602, 0
    %v1636 = vsel %vm92, %v1603, 0
    %v1639 = vsel %vm92, %v1604, 0
    %v1642 = vsel %vm92, %v1605, 0
    %v1645 = vsel %vm92, %v1606, 0
    %1647 = vmatprep.subr.mxu0 0.0
    %1648 = vmatpush1.msra.mxu0 %v1607
    %1649 = vmatprep.subr.mxu0 0.0
    %1650 = vmatpush1.msra.mxu0 %v1608
    %1651 = vmatprep.subr.mxu0 0.0
    %1652 = vmatpush1.msra.mxu0 %v1609
    %1653 = vmatprep.subr.mxu0 0.0
    %1654 = vmatpush1.msra.mxu0 %v1610
    %1655 = vmatprep.subr.mxu0 0.0
    %1656 = vmatpush1.msra.mxu0 0.0
    %1657 = vmatprep.subr.mxu0 0.0
    %1658 = vmatpush1.msra.mxu0 0.0
    %1659 = vmatprep.subr.mxu0 0.0
    %1660 = vmatpush1.msra.mxu0 0.0
    %1661 = vmatprep.subr.mxu0 0.0
    %1662 = vmatpush1.msra.mxu0 0.0
    %1663 = vmatprep.subr.mxu0 0.0
    %1664 = vmatpush1.msra.mxu0 0.0
    %1665 = vmatprep.subr.mxu0 0.0
    %1666 = vmatpush1.msra.mxu0 0.0
    %1667 = vmatprep.subr.mxu0 0.0
    %1668 = vmatpush1.msra.mxu0 0.0
    %1669 = vmatprep.subr.mxu0 0.0
    %1670 = vmatpush1.msra.mxu0 0.0
    %1671 = vmatprep.subr.mxu0 0.0
    %1672 = vmatpush1.msra.mxu0 0.0
    %1673 = vmatprep.subr.mxu0 0.0
    %1674 = vmatpush1.msra.mxu0 0.0
    %1675 = vmatprep.subr.mxu0 0.0
    %1676 = vmatpush1.msra.mxu0 0.0
    %1677 = vmatprep.subr.mxu0 0.0
    %1678 = vmatpush1.msra.mxu0 0.0
    %1679 = vmatprep.subr.mxu0 0.0
    %1680 = vmatpush1.msra.mxu0 0.0
    %1681 = vmatprep.subr.mxu0 0.0
    %1682 = vmatpush1.msra.mxu0 0.0
    %1683 = vmatprep.subr.mxu0 0.0
    %1684 = vmatpush1.msra.mxu0 0.0
    %1685 = vmatprep.subr.mxu0 0.0
    %1686 = vmatpush1.msra.mxu0 0.0
    %1687 = vmatprep.subr.mxu0 0.0
    %1688 = vmatpush1.msra.mxu0 0.0
    %1689 = vmatprep.subr.mxu0 0.0
    %1690 = vmatpush1.msra.mxu0 0.0
    %1691 = vmatprep.subr.mxu0 0.0
    %1692 = vmatpush1.msra.mxu0 0.0
    %1693 = vmatprep.subr.mxu0 0.0
    %1694 = vmatpush1.msra.mxu0 0.0
    %1695 = vmatprep.subr.mxu0 0.0
    %1696 = vmatpush1.msra.mxu0 0.0
    %1697 = vmatprep.subr.mxu0 0.0
    %1698 = vmatpush1.msra.mxu0 0.0
    %1699 = vmatprep.subr.mxu0 0.0
    %1700 = vmatpush1.msra.mxu0 0.0
    %1701 = vmatprep.subr.mxu0 0.0
    %1702 = vmatpush1.msra.mxu0 0.0
    %1703 = vmatprep.subr.mxu0 0.0
    %1704 = vmatpush1.msra.mxu0 0.0
    %1705 = vmatprep.subr.mxu0 0.0
    %1706 = vmatpush1.msra.mxu0 0.0
    %1707 = vmatprep.subr.mxu0 0.0
    %1708 = vmatpush1.msra.mxu0 0.0
    %1709 = vmatprep.subr.mxu0 0.0
    %1710 = vmatpush1.msra.mxu0 0.0
    %1711 = vmatprep.mubr.f32.mxu0 0.0
    %1712 = vmatmul.mubr.f32.gmra.mrb[0].mxu0 %v1612
    %v1713 = vpop.f32.mrb[0].mxu0
    %v1714 = vadd.f32 0.0, %v1713
    %v1715 = vpop.f32.mrb[0].mxu0
    %1716 = vmatprep.mubr.f32.mxu0 0.0
    %1717 = vmatmul.mubr.f32.gmra.mrb[0].mxu0 %v1615
    %v1718 = vpop.f32.mrb[0].mxu0
    %v1719 = vadd.f32 0.0, %v1718
    %v1720 = vpop.f32.mrb[0].mxu0
    %1721 = vmatprep.mubr.f32.mxu0 0.0
    %1722 = vmatmul.mubr.f32.gmra.mrb[0].mxu0 %v1618
    %v1723 = vpop.f32.mrb[0].mxu0
    %v1724 = vadd.f32 0.0, %v1723
    %v1725 = vpop.f32.mrb[0].mxu0
    %1726 = vmatprep.mubr.f32.mxu0 0.0
    %1727 = vmatmul.mubr.f32.gmra.mrb[0].mxu0 %v1621
    %v1728 = vpop.f32.mrb[0].mxu0
    %v1729 = vadd.f32 0.0, %v1728
    %v1730 = vpop.f32.mrb[0].mxu0
    %1731 = vmatprep.mubr.f32.mxu0 0.0
    %1732 = vmatmul.mubr.f32.gmra.mrb[0].mxu0 %v1624
    %v1733 = vpop.f32.mrb[0].mxu0
    %v1734 = vadd.f32 0.0, %v1733
    %v1735 = vpop.f32.mrb[0].mxu0
    %1736 = vmatprep.mubr.f32.mxu0 0.0
    %1737 = vmatmul.mubr.f32.gmra.mrb[0].mxu0 %v1627
    %v1738 = vpop.f32.mrb[0].mxu0
    %v1739 = vadd.f32 0.0, %v1738
    %v1740 = vpop.f32.mrb[0].mxu0
    %1741 = vmatprep.mubr.f32.mxu0 0.0
    %1742 = vmatmul.mubr.f32.gmra.mrb[0].mxu0 %v1630
    %v1743 = vpop.f32.mrb[0].mxu0
    %v1744 = vadd.f32 0.0, %v1743
    %v1745 = vpop.f32.mrb[0].mxu0
    %1746 = vmatprep.mubr.f32.mxu0 0.0
    %1747 = vmatmul.mubr.f32.gmra.mrb[0].mxu0 %v1633
    %v1748 = vpop.f32.mrb[0].mxu0
    %v1749 = vadd.f32 0.0, %v1748
    %v1750 = vpop.f32.mrb[0].mxu0
    %1751 = vmatprep.mubr.f32.mxu0 0.0
    %1752 = vmatmul.mubr.f32.gmra.mrb[0].mxu0 %v1636
    %v1753 = vpop.f32.mrb[0].mxu0
    %v1754 = vadd.f32 0.0, %v1753
    %v1755 = vpop.f32.mrb[0].mxu0
    %1756 = vmatprep.mubr.f32.mxu0 0.0
    %1757 = vmatmul.mubr.f32.gmra.mrb[0].mxu0 %v1639
    %v1758 = vpop.f32.mrb[0].mxu0
    %v1759 = vadd.f32 0.0, %v1758
    %v1760 = vpop.f32.mrb[0].mxu0
    %1761 = vmatprep.mubr.f32.mxu0 0.0
    %1762 = vmatmul.mubr.f32.gmra.mrb[0].mxu0 %v1642
    %v1763 = vpop.f32.mrb[0].mxu0
    %v1764 = vadd.f32 0.0, %v1763
    %v1765 = vpop.f32.mrb[0].mxu0
    %1766 = vmatprep.mubr.f32.mxu0 0.0
    %1767 = vmatmul.mubr.f32.gmra.mrb[0].mxu0 %v1645
    %v1768 = vpop.f32.mrb[0].mxu0
    %v1769 = vadd.f32 0.0, %v1768
    %v1770 = vpop.f32.mrb[0].mxu0
    %1771 = vdwg.mxu0
    %v1772 = vmax.f32 %v1714, 0.0
    %v1773 = vmax.f32 %v1719, 0.0
    %v1774 = vmax.f32 %v1724, 0.0
    %v1775 = vmax.f32 %v1729, 0.0
    %v1776 = vmax.f32 %v1734, 0.0
    %v1777 = vmax.f32 %v1739, 0.0
    %v1778 = vmax.f32 %v1744, 0.0
    %v1779 = vmax.f32 %v1749, 0.0
    %v1780 = vmax.f32 %v1754, 0.0
    %v1781 = vmax.f32 %v1759, 0.0
    %v1782 = vmax.f32 %v1764, 0.0
    %v1783 = vmax.f32 %v1769, 0.0
    %v1784 = vld [vmem:[%s15] sm:$0xff]
    %s1785 = sld [smem:[#allocation5]]
    %v1786 = vstv %s1785
    %v1787 = vmul.f32 %v1786, %v1772
    %v1788 = vmul.f32 %v1786, %v1773
    %v1789 = vmul.f32 %v1786, %v1774
    %v1790 = vmul.f32 %v1786, %v1775
    %s1791 = sld [smem:[#allocation5 + $0x3]]
    %v1792 = vstv %s1791
    %v1793 = vmul.f32 %v1792, %v1776
    %v1794 = vmul.f32 %v1792, %v1777
    %v1795 = vmul.f32 %v1792, %v1778
    %v1796 = vmul.f32 %v1792, %v1779
    %v1797 = vadd.f32 %v1787, %v1793
    %v1798 = vadd.f32 %v1788, %v1794
    %v1799 = vadd.f32 %v1789, %v1795
    %v1800 = vadd.f32 %v1790, %v1796
    %s1801 = sld [smem:[#allocation5 + $0x6]]
    %v1802 = vstv %s1801
    %v1803 = vmul.f32 %v1802, %v1780
    %v1804 = vmul.f32 %v1802, %v1781
    %v1805 = vmul.f32 %v1802, %v1782
    %v1806 = vmul.f32 %v1802, %v1783
    %v1807 = vadd.f32 %v1797, %v1803
    %v1808 = vadd.f32 %v1798, %v1804
    %v1809 = vadd.f32 %v1799, %v1805
    %v1810 = vadd.f32 %v1800, %v1806
    %v1811 = vmax.f32 %v1807, 0.0
    %v1812 = vmax.f32 %v1808, 0.0
    %v1813 = vmax.f32 %v1809, 0.0
    %v1814 = vmax.f32 %v1810, 0.0
    %v1816 = vsel %vm92, %v1784, 0
    %1818 = vmatprep.subr.mxu0 0.0
    %1819 = vmatpush1.msra.mxu0 %v1811
    %1820 = vmatprep.subr.mxu0 0.0
    %1821 = vmatpush1.msra.mxu0 %v1812
    %1822 = vmatprep.subr.mxu0 0.0
    %1823 = vmatpush1.msra.mxu0 %v1813
    %1824 = vmatprep.subr.mxu0 0.0
    %1825 = vmatpush1.msra.mxu0 %v1814
    %1826 = vmatprep.subr.mxu0 0.0
    %1827 = vmatpush1.msra.mxu0 0.0
    %1828 = vmatprep.subr.mxu0 0.0
    %1829 = vmatpush1.msra.mxu0 0.0
    %1830 = vmatprep.subr.mxu0 0.0
    %1831 = vmatpush1.msra.mxu0 0.0
    %1832 = vmatprep.subr.mxu0 0.0
    %1833 = vmatpush1.msra.mxu0 0.0
    %1834 = vmatprep.subr.mxu0 0.0
    %1835 = vmatpush1.msra.mxu0 0.0
    %1836 = vmatprep.subr.mxu0 0.0
    %1837 = vmatpush1.msra.mxu0 0.0
    %1838 = vmatprep.subr.mxu0 0.0
    %1839 = vmatpush1.msra.mxu0 0.0
    %1840 = vmatprep.subr.mxu0 0.0
    %1841 = vmatpush1.msra.mxu0 0.0
    %1842 = vmatprep.subr.mxu0 0.0
    %1843 = vmatpush1.msra.mxu0 0.0
    %1844 = vmatprep.subr.mxu0 0.0
    %1845 = vmatpush1.msra.mxu0 0.0
    %1846 = vmatprep.subr.mxu0 0.0
    %1847 = vmatpush1.msra.mxu0 0.0
    %1848 = vmatprep.subr.mxu0 0.0
    %1849 = vmatpush1.msra.mxu0 0.0
    %1850 = vmatprep.subr.mxu0 0.0
    %1851 = vmatpush1.msra.mxu0 0.0
    %1852 = vmatprep.subr.mxu0 0.0
    %1853 = vmatpush1.msra.mxu0 0.0
    %1854 = vmatprep.subr.mxu0 0.0
    %1855 = vmatpush1.msra.mxu0 0.0
    %1856 = vmatprep.subr.mxu0 0.0
    %1857 = vmatpush1.msra.mxu0 0.0
    %1858 = vmatprep.subr.mxu0 0.0
    %1859 = vmatpush1.msra.mxu0 0.0
    %1860 = vmatprep.subr.mxu0 0.0
    %1861 = vmatpush1.msra.mxu0 0.0
    %1862 = vmatprep.subr.mxu0 0.0
    %1863 = vmatpush1.msra.mxu0 0.0
    %1864 = vmatprep.subr.mxu0 0.0
    %1865 = vmatpush1.msra.mxu0 0.0
    %1866 = vmatprep.subr.mxu0 0.0
    %1867 = vmatpush1.msra.mxu0 0.0
    %1868 = vmatprep.subr.mxu0 0.0
    %1869 = vmatpush1.msra.mxu0 0.0
    %1870 = vmatprep.subr.mxu0 0.0
    %1871 = vmatpush1.msra.mxu0 0.0
    %1872 = vmatprep.subr.mxu0 0.0
    %1873 = vmatpush1.msra.mxu0 0.0
    %1874 = vmatprep.subr.mxu0 0.0
    %1875 = vmatpush1.msra.mxu0 0.0
    %1876 = vmatprep.subr.mxu0 0.0
    %1877 = vmatpush1.msra.mxu0 0.0
    %1878 = vmatprep.subr.mxu0 0.0
    %1879 = vmatpush1.msra.mxu0 0.0
    %1880 = vmatprep.subr.mxu0 0.0
    %1881 = vmatpush1.msra.mxu0 0.0
    %1882 = vmatprep.mubr.f32.mxu0 0.0
    %1883 = vmatmul.mubr.f32.gmra.mrb[0].mxu0 %v1816
    %v1884 = vpop.f32.mrb[0].mxu0
    %v1885 = vadd.f32 0.0, %v1884
    %v1886 = vpop.f32.mrb[0].mxu0
    %1887 = vdwg.mxu0
    %v1888 = vmax.f32 %v1885, 0.0
    %v1889 = vadd.f32 %v1888, 0.0
    %s1890 = sld [smem:[#allocation5 + $0x1]]
    %v1891 = vstv %s1890
    %v1892 = vmul.f32 %v1891, %v1772
    %v1893 = vmul.f32 %v1891, %v1773
    %v1894 = vmul.f32 %v1891, %v1774
    %v1895 = vmul.f32 %v1891, %v1775
    %s1896 = sld [smem:[#allocation5 + $0x4]]
    %v1897 = vstv %s1896
    %v1898 = vmul.f32 %v1897, %v1776
    %v1899 = vmul.f32 %v1897, %v1777
    %v1900 = vmul.f32 %v1897, %v1778
    %v1901 = vmul.f32 %v1897, %v1779
    %v1902 = vadd.f32 %v1892, %v1898
    %v1903 = vadd.f32 %v1893, %v1899
    %v1904 = vadd.f32 %v1894, %v1900
    %v1905 = vadd.f32 %v1895, %v1901
    %s1906 = sld [smem:[#allocation5 + $0x7]]
    %v1907 = vstv %s1906
    %v1908 = vmul.f32 %v1907, %v1780
    %v1909 = vmul.f32 %v1907, %v1781
    %v1910 = vmul.f32 %v1907, %v1782
    %v1911 = vmul.f32 %v1907, %v1783
    %v1912 = vadd.f32 %v1902, %v1908
    %v1913 = vadd.f32 %v1903, %v1909
    %v1914 = vadd.f32 %v1904, %v1910
    %v1915 = vadd.f32 %v1905, %v1911
    %v1916 = vmax.f32 %v1912, 0.0
    %v1917 = vmax.f32 %v1913, 0.0
    %v1918 = vmax.f32 %v1914, 0.0
    %v1919 = vmax.f32 %v1915, 0.0
    %1920 = vmatprep.subr.mxu0 0.0
    %1921 = vmatpush1.msra.mxu0 %v1916
    %1922 = vmatprep.subr.mxu0 0.0
    %1923 = vmatpush1.msra.mxu0 %v1917
    %1924 = vmatprep.subr.mxu0 0.0
    %1925 = vmatpush1.msra.mxu0 %v1918
    %1926 = vmatprep.subr.mxu0 0.0
    %1927 = vmatpush1.msra.mxu0 %v1919
    %1928 = vmatprep.subr.mxu0 0.0
    %1929 = vmatpush1.msra.mxu0 0.0
    %1930 = vmatprep.subr.mxu0 0.0
    %1931 = vmatpush1.msra.mxu0 0.0
    %1932 = vmatprep.subr.mxu0 0.0
    %1933 = vmatpush1.msra.mxu0 0.0
    %1934 = vmatprep.subr.mxu0 0.0
    %1935 = vmatpush1.msra.mxu0 0.0
    %1936 = vmatprep.subr.mxu0 0.0
    %1937 = vmatpush1.msra.mxu0 0.0
    %1938 = vmatprep.subr.mxu0 0.0
    %1939 = vmatpush1.msra.mxu0 0.0
    %1940 = vmatprep.subr.mxu0 0.0
    %1941 = vmatpush1.msra.mxu0 0.0
    %1942 = vmatprep.subr.mxu0 0.0
    %1943 = vmatpush1.msra.mxu0 0.0
    %1944 = vmatprep.subr.mxu0 0.0
    %1945 = vmatpush1.msra.mxu0 0.0
    %1946 = vmatprep.subr.mxu0 0.0
    %1947 = vmatpush1.msra.mxu0 0.0
    %1948 = vmatprep.subr.mxu0 0.0
    %1949 = vmatpush1.msra.mxu0 0.0
    %1950 = vmatprep.subr.mxu0 0.0
    %1951 = vmatpush1.msra.mxu0 0.0
    %1952 = vmatprep.subr.mxu0 0.0
    %1953 = vmatpush1.msra.mxu0 0.0
    %1954 = vmatprep.subr.mxu0 0.0
    %1955 = vmatpush1.msra.mxu0 0.0
    %1956 = vmatprep.subr.mxu0 0.0
    %1957 = vmatpush1.msra.mxu0 0.0
    %1958 = vmatprep.subr.mxu0 0.0
    %1959 = vmatpush1.msra.mxu0 0.0
    %1960 = vmatprep.subr.mxu0 0.0
    %1961 = vmatpush1.msra.mxu0 0.0
    %1962 = vmatprep.subr.mxu0 0.0
    %1963 = vmatpush1.msra.mxu0 0.0
    %1964 = vmatprep.subr.mxu0 0.0
    %1965 = vmatpush1.msra.mxu0 0.0
    %1966 = vmatprep.subr.mxu0 0.0
    %1967 = vmatpush1.msra.mxu0 0.0
    %1968 = vmatprep.subr.mxu0 0.0
    %1969 = vmatpush1.msra.mxu0 0.0
    %1970 = vmatprep.subr.mxu0 0.0
    %1971 = vmatpush1.msra.mxu0 0.0
    %1972 = vmatprep.subr.mxu0 0.0
    %1973 = vmatpush1.msra.mxu0 0.0
    %1974 = vmatprep.subr.mxu0 0.0
    %1975 = vmatpush1.msra.mxu0 0.0
    %1976 = vmatprep.subr.mxu0 0.0
    %1977 = vmatpush1.msra.mxu0 0.0
    %1978 = vmatprep.subr.mxu0 0.0
    %1979 = vmatpush1.msra.mxu0 0.0
    %1980 = vmatprep.subr.mxu0 0.0
    %1981 = vmatpush1.msra.mxu0 0.0
    %1982 = vmatprep.subr.mxu0 0.0
    %1983 = vmatpush1.msra.mxu0 0.0
    %1984 = vmatprep.mubr.f32.mxu0 0.0
    %1985 = vmatmul.mubr.f32.gmra.mrb[0].mxu0 %v1816
    %v1986 = vpop.f32.mrb[0].mxu0
    %v1987 = vadd.f32 0.0, %v1986
    %v1988 = vpop.f32.mrb[0].mxu0
    %1989 = vdwg.mxu0
    %v1990 = vmax.f32 %v1987, 0.0
    %v1991 = vadd.f32 %v1889, %v1990
    %s1992 = sld [smem:[#allocation5 + $0x2]]
    %v1993 = vstv %s1992
    %v1994 = vmul.f32 %v1993, %v1772
    %v1995 = vmul.f32 %v1993, %v1773
    %v1996 = vmul.f32 %v1993, %v1774
    %v1997 = vmul.f32 %v1993, %v1775
    %s1998 = sld [smem:[#allocation5 + $0x5]]
    %v1999 = vstv %s1998
    %v2000 = vmul.f32 %v1999, %v1776
    %v2001 = vmul.f32 %v1999, %v1777
    %v2002 = vmul.f32 %v1999, %v1778
    %v2003 = vmul.f32 %v1999, %v1779
    %v2004 = vadd.f32 %v1994, %v2000
    %v2005 = vadd.f32 %v1995, %v2001
    %v2006 = vadd.f32 %v1996, %v2002
    %v2007 = vadd.f32 %v1997, %v2003
    %s2008 = sld [smem:[#allocation5 + $0x8]]
    %v2009 = vstv %s2008
    %v2010 = vmul.f32 %v2009, %v1780
    %v2011 = vmul.f32 %v2009, %v1781
    %v2012 = vmul.f32 %v2009, %v1782
    %v2013 = vmul.f32 %v2009, %v1783
    %v2014 = vadd.f32 %v2004, %v2010
    %v2015 = vadd.f32 %v2005, %v2011
    %v2016 = vadd.f32 %v2006, %v2012
    %v2017 = vadd.f32 %v2007, %v2013
    %v2018 = vmax.f32 %v2014, 0.0
    %v2019 = vmax.f32 %v2015, 0.0
    %v2020 = vmax.f32 %v2016, 0.0
    %v2021 = vmax.f32 %v2017, 0.0
    %2022 = vmatprep.subr.mxu0 0.0
    %2023 = vmatpush1.msra.mxu0 %v2018
    %2024 = vmatprep.subr.mxu0 0.0
    %2025 = vmatpush1.msra.mxu0 %v2019
    %2026 = vmatprep.subr.mxu0 0.0
    %2027 = vmatpush1.msra.mxu0 %v2020
    %2028 = vmatprep.subr.mxu0 0.0
    %2029 = vmatpush1.msra.mxu0 %v2021
    %2030 = vmatprep.subr.mxu0 0.0
    %2031 = vmatpush1.msra.mxu0 0.0
    %2032 = vmatprep.subr.mxu0 0.0
    %2033 = vmatpush1.msra.mxu0 0.0
    %2034 = vmatprep.subr.mxu0 0.0
    %2035 = vmatpush1.msra.mxu0 0.0
    %2036 = vmatprep.subr.mxu0 0.0
    %2037 = vmatpush1.msra.mxu0 0.0
    %2038 = vmatprep.subr.mxu0 0.0
    %2039 = vmatpush1.msra.mxu0 0.0
    %2040 = vmatprep.subr.mxu0 0.0
    %2041 = vmatpush1.msra.mxu0 0.0
    %2042 = vmatprep.subr.mxu0 0.0
    %2043 = vmatpush1.msra.mxu0 0.0
    %2044 = vmatprep.subr.mxu0 0.0
    %2045 = vmatpush1.msra.mxu0 0.0
    %2046 = vmatprep.subr.mxu0 0.0
    %2047 = vmatpush1.msra.mxu0 0.0
    %2048 = vmatprep.subr.mxu0 0.0
    %2049 = vmatpush1.msra.mxu0 0.0
    %2050 = vmatprep.subr.mxu0 0.0
    %2051 = vmatpush1.msra.mxu0 0.0
    %2052 = vmatprep.subr.mxu0 0.0
    %2053 = vmatpush1.msra.mxu0 0.0
    %2054 = vmatprep.subr.mxu0 0.0
    %2055 = vmatpush1.msra.mxu0 0.0
    %2056 = vmatprep.subr.mxu0 0.0
    %2057 = vmatpush1.msra.mxu0 0.0
    %2058 = vmatprep.subr.mxu0 0.0
    %2059 = vmatpush1.msra.mxu0 0.0
    %2060 = vmatprep.subr.mxu0 0.0
    %2061 = vmatpush1.msra.mxu0 0.0
    %2062 = vmatprep.subr.mxu0 0.0
    %2063 = vmatpush1.msra.mxu0 0.0
    %2064 = vmatprep.subr.mxu0 0.0
    %2065 = vmatpush1.msra.mxu0 0.0
    %2066 = vmatprep.subr.mxu0 0.0
    %2067 = vmatpush1.msra.mxu0 0.0
    %2068 = vmatprep.subr.mxu0 0.0
    %2069 = vmatpush1.msra.mxu0 0.0
    %2070 = vmatprep.subr.mxu0 0.0
    %2071 = vmatpush1.msra.mxu0 0.0
    %2072 = vmatprep.subr.mxu0 0.0
    %2073 = vmatpush1.msra.mxu0 0.0
    %2074 = vmatprep.subr.mxu0 0.0
    %2075 = vmatpush1.msra.mxu0 0.0
    %2076 = vmatprep.subr.mxu0 0.0
    %2077 = vmatpush1.msra.mxu0 0.0
    %2078 = vmatprep.subr.mxu0 0.0
    %2079 = vmatpush1.msra.mxu0 0.0
    %2080 = vmatprep.subr.mxu0 0.0
    %2081 = vmatpush1.msra.mxu0 0.0
    %2082 = vmatprep.subr.mxu0 0.0
    %2083 = vmatpush1.msra.mxu0 0.0
    %2084 = vmatprep.subr.mxu0 0.0
    %2085 = vmatpush1.msra.mxu0 0.0
    %2086 = vmatprep.mubr.f32.mxu0 0.0
    %2087 = vmatmul.mubr.f32.gmra.mrb[0].mxu0 %v1816
    %v2088 = vpop.f32.mrb[0].mxu0
    %v2089 = vadd.f32 0.0, %v2088
    %v2090 = vpop.f32.mrb[0].mxu0
    %2091 = vdwg.mxu0
    %v2092 = vmax.f32 %v2089, 0.0
    %v2093 = vadd.f32 %v1991, %v2092
    %v2094 = vld [vmem:[%s16] sm:$0x3]
    %vm2095 = vcmask 64512
    %v2097 = vsel %vm2095, %v2094, 0
    %2099 = vmatprep.subr.mxu0 0.0
    %2100 = vmatpush1.msra.mxu0 %v2093
    %2101 = vmatprep.subr.mxu0 0.0
    %2102 = vmatpush1.msra.mxu0 0.0
    %2103 = vmatprep.subr.mxu0 0.0
    %2104 = vmatpush1.msra.mxu0 0.0
    %2105 = vmatprep.subr.mxu0 0.0
    %2106 = vmatpush1.msra.mxu0 0.0
    %2107 = vmatprep.subr.mxu0 0.0
    %2108 = vmatpush1.msra.mxu0 0.0
    %2109 = vmatprep.subr.mxu0 0.0
    %2110 = vmatpush1.msra.mxu0 0.0
    %2111 = vmatprep.subr.mxu0 0.0
    %2112 = vmatpush1.msra.mxu0 0.0
    %2113 = vmatprep.subr.mxu0 0.0
    %2114 = vmatpush1.msra.mxu0 0.0
    %2115 = vmatprep.subr.mxu0 0.0
    %2116 = vmatpush1.msra.mxu0 0.0
    %2117 = vmatprep.subr.mxu0 0.0
    %2118 = vmatpush1.msra.mxu0 0.0
    %2119 = vmatprep.subr.mxu0 0.0
    %2120 = vmatpush1.msra.mxu0 0.0
    %2121 = vmatprep.subr.mxu0 0.0
    %2122 = vmatpush1.msra.mxu0 0.0
    %2123 = vmatprep.subr.mxu0 0.0
    %2124 = vmatpush1.msra.mxu0 0.0
    %2125 = vmatprep.subr.mxu0 0.0
    %2126 = vmatpush1.msra.mxu0 0.0
    %2127 = vmatprep.subr.mxu0 0.0
    %2128 = vmatpush1.msra.mxu0 0.0
    %2129 = vmatprep.subr.mxu0 0.0
    %2130 = vmatpush1.msra.mxu0 0.0
    %2131 = vmatprep.subr.mxu0 0.0
    %2132 = vmatpush1.msra.mxu0 0.0
    %2133 = vmatprep.subr.mxu0 0.0
    %2134 = vmatpush1.msra.mxu0 0.0
    %2135 = vmatprep.subr.mxu0 0.0
    %2136 = vmatpush1.msra.mxu0 0.0
    %2137 = vmatprep.subr.mxu0 0.0
    %2138 = vmatpush1.msra.mxu0 0.0
    %2139 = vmatprep.subr.mxu0 0.0
    %2140 = vmatpush1.msra.mxu0 0.0
    %2141 = vmatprep.subr.mxu0 0.0
    %2142 = vmatpush1.msra.mxu0 0.0
    %2143 = vmatprep.subr.mxu0 0.0
    %2144 = vmatpush1.msra.mxu0 0.0
    %2145 = vmatprep.subr.mxu0 0.0
    %2146 = vmatpush1.msra.mxu0 0.0
    %2147 = vmatprep.subr.mxu0 0.0
    %2148 = vmatpush1.msra.mxu0 0.0
    %2149 = vmatprep.subr.mxu0 0.0
    %2150 = vmatpush1.msra.mxu0 0.0
    %2151 = vmatprep.subr.mxu0 0.0
    %2152 = vmatpush1.msra.mxu0 0.0
    %2153 = vmatprep.subr.mxu0 0.0
    %2154 = vmatpush1.msra.mxu0 0.0
    %2155 = vmatprep.subr.mxu0 0.0
    %2156 = vmatpush1.msra.mxu0 0.0
    %2157 = vmatprep.subr.mxu0 0.0
    %2158 = vmatpush1.msra.mxu0 0.0
    %2159 = vmatprep.subr.mxu0 0.0
    %2160 = vmatpush1.msra.mxu0 0.0
    %2161 = vmatprep.subr.mxu0 0.0
    %2162 = vmatpush1.msra.mxu0 0.0
    %2163 = vmatprep.mubr.f32.mxu0 0.0
    %2164 = vmatmul.mubr.f32.gmra.mrb[0].mxu0 %v2097
    %v2165 = vpop.f32.mrb[0].mxu0
    %v2166 = vadd.f32 0.0, %v2165
    %v2167 = vpop.f32.mrb[0].mxu0
    %2168 = vdwg.mxu0
    %v2169 = vld [vmem:[%s17] sm:$0xff]
    %v2170 = vld [vmem:[%s17 + $0x8] sm:$0xff]
    %v2171 = vld [vmem:[%s17 + $0x10] sm:$0xff]
    %v2172 = vld [vmem:[%s17 + $0x18] sm:$0xff]
    %v2173 = vld [vmem:[%s18] sm:$0x1]
    %v2175 = vlaneseq
    %v2176 = vshrl.u32 %v2175, 7
    %v2177 = vsub.s32 0, %v2176
    %v2178 = vrot.slane %v2173, %v2177
    %v2181 = vsel %vm92, %v2166, 0
    %2183 = vmatprep.subr.mxu0 0.0
    %2184 = vmatpush1.msra.mxu0 %v2169
    %2185 = vmatprep.subr.mxu0 0.0
    %2186 = vmatpush1.msra.mxu0 %v2170
    %2187 = vmatprep.subr.mxu0 0.0
    %2188 = vmatpush1.msra.mxu0 %v2171
    %2189 = vmatprep.subr.mxu0 0.0
    %2190 = vmatpush1.msra.mxu0 %v2172
    %2191 = vmatprep.subr.mxu0 0.0
    %2192 = vmatpush1.msra.mxu0 0.0
    %2193 = vmatprep.subr.mxu0 0.0
    %2194 = vmatpush1.msra.mxu0 0.0
    %2195 = vmatprep.subr.mxu0 0.0
    %2196 = vmatpush1.msra.mxu0 0.0
    %2197 = vmatprep.subr.mxu0 0.0
    %2198 = vmatpush1.msra.mxu0 0.0
    %2199 = vmatprep.subr.mxu0 0.0
    %2200 = vmatpush1.msra.mxu0 0.0
    %2201 = vmatprep.subr.mxu0 0.0
    %2202 = vmatpush1.msra.mxu0 0.0
    %2203 = vmatprep.subr.mxu0 0.0
    %2204 = vmatpush1.msra.mxu0 0.0
    %2205 = vmatprep.subr.mxu0 0.0
    %2206 = vmatpush1.msra.mxu0 0.0
    %2207 = vmatprep.subr.mxu0 0.0
    %2208 = vmatpush1.msra.mxu0 0.0
    %2209 = vmatprep.subr.mxu0 0.0
    %2210 = vmatpush1.msra.mxu0 0.0
    %2211 = vmatprep.subr.mxu0 0.0
    %2212 = vmatpush1.msra.mxu0 0.0
    %2213 = vmatprep.subr.mxu0 0.0
    %2214 = vmatpush1.msra.mxu0 0.0
    %2215 = vmatprep.subr.mxu0 0.0
    %2216 = vmatpush1.msra.mxu0 0.0
    %2217 = vmatprep.subr.mxu0 0.0
    %2218 = vmatpush1.msra.mxu0 0.0
    %2219 = vmatprep.subr.mxu0 0.0
    %2220 = vmatpush1.msra.mxu0 0.0
    %2221 = vmatprep.subr.mxu0 0.0
    %2222 = vmatpush1.msra.mxu0 0.0
    %2223 = vmatprep.subr.mxu0 0.0
    %2224 = vmatpush1.msra.mxu0 0.0
    %2225 = vmatprep.subr.mxu0 0.0
    %2226 = vmatpush1.msra.mxu0 0.0
    %2227 = vmatprep.subr.mxu0 0.0
    %2228 = vmatpush1.msra.mxu0 0.0
    %2229 = vmatprep.subr.mxu0 0.0
    %2230 = vmatpush1.msra.mxu0 0.0
    %2231 = vmatprep.subr.mxu0 0.0
    %2232 = vmatpush1.msra.mxu0 0.0
    %2233 = vmatprep.subr.mxu0 0.0
    %2234 = vmatpush1.msra.mxu0 0.0
    %2235 = vmatprep.subr.mxu0 0.0
    %2236 = vmatpush1.msra.mxu0 0.0
    %2237 = vmatprep.subr.mxu0 0.0
    %2238 = vmatpush1.msra.mxu0 0.0
    %2239 = vmatprep.subr.mxu0 0.0
    %2240 = vmatpush1.msra.mxu0 0.0
    %2241 = vmatprep.subr.mxu0 0.0
    %2242 = vmatpush1.msra.mxu0 0.0
    %2243 = vmatprep.subr.mxu0 0.0
    %2244 = vmatpush1.msra.mxu0 0.0
    %2245 = vmatprep.subr.mxu0 0.0
    %2246 = vmatpush1.msra.mxu0 0.0
    %2247 = vmatprep.mubr.f32.mxu0 0.0
    %2248 = vmatmul.mubr.f32.gmra.mrb[0].mxu0 %v2181
    %v2249 = vpop.f32.mrb[0].mxu0
    %v2250 = vadd.f32 %v2178, %v2249
    %v2251 = vpop.f32.mrb[0].mxu0
    %2252 = vdwg.mxu0
    %vm2253 = vcmask 17408
    %2254 = vst.msk [vmem:[#allocation8] sm:$0x3] %vm2253, %v2250
    // Predicated region
    $region82: #{model_forward.1} parent=1 // pred_check
      _
    $region83: #{model_forward.1} parent=1 // pred_check_branch
      %2256 = sbr.rel (0) target = $region85
    $region84: #{model_forward.1} parent=1 // pred_region
      %s2258 = ssub.s32 32, 32
      %2259 = vsyncadd [#allocation6], %s2258
      %s2261 = sshll.u32 [#allocation8], 4
      %s2262 = int_to_ptr.vmem [resolvable:$true] %s2261
      %2264 = dma.vmem_to_hbm [thread:$0]  %s2262, 32, %s19, [#allocation6]
    $region85: #{model_forward.1} parent=1 // pred_fallthru
      _
    // Predicated region
    $region86: #{model_forward.1} parent=1 // pred_check
      _
    $region87: #{model_forward.1} parent=1 // pred_check_branch
      %2266 = sbr.rel (0) target = $region89
    $region88: #{model_forward.1} parent=1 // pred_region
      %2267 = dma.done [#allocation6], 32
    $region89: #{model_forward.1} parent=1 // pred_fallthru
      _
    %2268 = vsyncpa [#allocation6], 1
    %2269 = vsyncpa [#allocation7], 1

</llo_original>
